<compile_context>
chip_gen: v7x
topology: tpu7x:2x2x1
jax: 0.10.0
libtpu: 0.0.40
codegen_flags: <defaults>
</compile_context>

<pallas_src>
import functools

import numpy as np
import jax
import jax.numpy as jnp
from jax.experimental import pallas as pl
from jax.experimental.pallas import tpu as pltpu


def _round_up(x, m):
    return ((x + m - 1) // m) * m


def _pick_tile(n):
    """Node tile: full (8-aligned) extent for tiny graphs, else 128/256/512."""
    if n <= 128:
        return _round_up(n, 8)
    for t in (512, 256):
        if (_round_up(n, t) - n) * 8 <= n:      # <= 12.5% padding waste
            return t
    return 128


# ---------------------------------------------------------------------------
# Kernel 1: GINConv('sum') aggregation + (rotation-folded) Linear + ELU
#           + fused semantic-attention per-node score.
# Grid: (path, dst_tile, src_tile); src_tile is the reduction axis.
# ---------------------------------------------------------------------------
def _gin_kernel(n_src_tiles, use_bf16,
                h_ref, adj_ref, w_ref, b_ref, w1_ref, b1_ref, w2_ref,
                z_ref, s_ref, acc_ref):
    k = pl.program_id(2)

    @pl.when(k == 0)
    def _init():
        acc_ref[...] = jnp.zeros_like(acc_ref)

    # (A_p + I) @ [t1 | t2]: one MXU matmul per (dst, src) tile pair.
    acc_ref[...] += jnp.dot(adj_ref[...], h_ref[...],
                            preferred_element_type=jnp.float32)

    @pl.when(k == n_src_tiles - 1)
    def _finalize():
        agg = acc_ref[...]
        if use_bf16:
            agg = agg.astype(jnp.bfloat16)
        # GIN linear with the relational rotation pre-folded into the weight.
        lin = (jnp.dot(agg, w_ref[...], preferred_element_type=jnp.float32)
               + b_ref[...])
        z = jnp.where(lin > 0, lin, jnp.exp(lin) - 1.0)        # ELU(alpha=1)
        z_ref[...] = z
        # Fused semantic-attention score: sum(tanh(z @ W1 + b1) * w2, -1).
        # Emitted as a tiny (tile, 1) side output so z never needs a second
        # HBM pass for scoring.
        proj = jnp.tanh(
            jnp.dot(z, w1_ref[...], preferred_element_type=jnp.float32)
            + b1_ref[...])
        s_ref[...] = jnp.sum(proj * w2_ref[...], axis=-1, keepdims=True)


# ---------------------------------------------------------------------------
# Kernel 2: node-tiled weighted sum over paths  out = sum_p beta[p] * z[p]
# ---------------------------------------------------------------------------
def _weighted_sum_kernel(num_paths, beta_ref, z_ref, out_ref):
    acc = beta_ref[0] * z_ref[0]
    for p in range(1, num_paths):
        acc = acc + beta_ref[p] * z_ref[p]
    out_ref[...] = acc


# ---------------------------------------------------------------------------
# Wrapper: padding, rotation composition / weight folding, softmax glue.
# ---------------------------------------------------------------------------
def han_layer_forward(node_emb, edge_emb, adjs, paths, tag,
                      gin_w, gin_b, sem_w1, sem_b1, sem_w2,
                      use_bf16_matmul=True):
    n, f = node_emb.shape
    p_paths, _, o = gin_w.shape
    half = f // 2
    hid = sem_w1.shape[1]
    f32 = jnp.float32
    mm_dtype = jnp.bfloat16 if use_bf16_matmul else f32

    # ---- padded / tiled geometry -------------------------------------------
    tile_n = _pick_tile(n)
    n_pad = _round_up(n, tile_n)
    n_tiles = n_pad // tile_n                  # dst tiles == src tiles
    f_pad = _round_up(f, 128)
    o_pad = _round_up(o, 128)
    hid_pad = _round_up(hid, 128)

    # ---- edge-embedding normalization (r_vec) ------------------------------
    r1, r2 = jnp.split(edge_emb.astype(f32), 2, axis=-1)       # (E, half)
    norm = jnp.maximum(jnp.sqrt(r1 * r1 + r2 * r2), 1e-12)
    ra = r1 / norm
    rb = r2 / norm

    # ---- compose per-path 2x2 rotation and fold it into the GIN weight -----
    # Rotation mixes the two feature halves per column; being a per-column
    # linear map, it commutes with (A+I) aggregation, so it can be applied to
    # the weight instead of the features.
    w_rot_list = []
    for idx, pth in enumerate(paths):
        m11 = jnp.ones((half,), f32)
        m12 = jnp.zeros((half,), f32)
        m21 = jnp.zeros((half,), f32)
        m22 = jnp.ones((half,), f32)
        seq = list(pth) if tag == 'in' else list(reversed(pth))
        for e in seq:
            a = ra[e - 1]
            b = rb[e - 1]
            if tag == 'in':
                # t1' = a*t1 - b*t2 ; t2' = b*t1' + a*t2
                s11, s12, s21, s22 = a, -b, a * b, a - b * b
            elif tag == 'out':
                # t1' = a*t1 + b*t2 ; t2' = a*t2 - b*t1'
                s11, s12, s21, s22 = a, b, -(a * b), a - b * b
            else:
                raise Exception('tag error')
            m11, m12, m21, m22 = (s11 * m11 + s12 * m21,
                                  s11 * m12 + s12 * m22,
                                  s21 * m11 + s22 * m21,
                                  s21 * m12 + s22 * m22)
        wa = gin_w[idx, :half, :].astype(f32)                  # (half, o)
        wb = gin_w[idx, half:, :].astype(f32)
        w_rot_list.append(jnp.concatenate(
            [m11[:, None] * wa + m21[:, None] * wb,
             m12[:, None] * wa + m22[:, None] * wb], axis=0))  # (f, o)
    w_rot = jnp.stack(w_rot_list, axis=0)                      # (P, f, o)
    w_rot = jnp.pad(w_rot, ((0, 0), (0, f_pad - f), (0, o_pad - o)))
    w_rot = w_rot.astype(mm_dtype)

    # ---- node features packed as [t1 | t2], zero padded ---------------------
    h3 = node_emb.astype(f32).reshape(n, half, 2)
    h_cat = jnp.concatenate([h3[:, :, 0], h3[:, :, 1]], axis=-1)   # (n, f)
    h_cat = jnp.pad(h_cat, ((0, n_pad - n), (0, f_pad - f))).astype(mm_dtype)

    # ---- adjacency: GIN 'sum', eps=0 -> (A + I) @ h; bf16 is exact ----------
    eye = jnp.eye(n, dtype=f32)
    adj_pi = jnp.pad(adjs.astype(f32) + eye[None],
                     ((0, 0), (0, n_pad - n), (0, n_pad - n)))
    adj_pi = adj_pi.astype(jnp.bfloat16)

    # ---- bias + semantic-attention projection params (lane padded) ---------
    bias = jnp.pad(gin_b.astype(f32), ((0, 0), (0, o_pad - o)))
    bias = bias.reshape(p_paths, 1, o_pad)
    w1 = jnp.pad(sem_w1.astype(f32), ((0, o_pad - o), (0, hid_pad - hid)))
    b1 = jnp.pad(sem_b1.astype(f32).reshape(1, hid),
                 ((0, 0), (0, hid_pad - hid)))
    w2 = jnp.pad(sem_w2.astype(f32).reshape(1, hid),
                 ((0, 0), (0, hid_pad - hid)))

    cost1 = pl.CostEstimate(
        flops=(2 * p_paths * n_pad * n_pad * f_pad
               + 2 * p_paths * n_pad * f_pad * o_pad
               + 2 * p_paths * n_pad * o_pad * hid_pad),
        transcendentals=p_paths * n_pad * (o_pad + hid_pad),
        bytes_accessed=(adj_pi.size * adj_pi.dtype.itemsize
                        + p_paths * n_tiles * n_pad * f_pad
                        * h_cat.dtype.itemsize
                        + p_paths * n_pad * (o_pad + 1) * 4))

    z, score = pl.pallas_call(
        functools.partial(_gin_kernel, n_tiles, use_bf16_matmul),
        out_shape=(jax.ShapeDtypeStruct((p_paths, n_pad, o_pad), f32),
                   jax.ShapeDtypeStruct((p_paths, n_pad, 1), f32)),
        grid_spec=pltpu.PrefetchScalarGridSpec(
            num_scalar_prefetch=0,
            grid=(p_paths, n_tiles, n_tiles),
            in_specs=[
                pl.BlockSpec((tile_n, f_pad), lambda p, i, k: (k, 0)),
                pl.BlockSpec((None, tile_n, tile_n), lambda p, i, k: (p, i, k)),
                pl.BlockSpec((None, f_pad, o_pad), lambda p, i, k: (p, 0, 0)),
                pl.BlockSpec((None, 1, o_pad), lambda p, i, k: (p, 0, 0)),
                pl.BlockSpec((o_pad, hid_pad), lambda p, i, k: (0, 0)),
                pl.BlockSpec((1, hid_pad), lambda p, i, k: (0, 0)),
                pl.BlockSpec((1, hid_pad), lambda p, i, k: (0, 0)),
            ],
            out_specs=[
                pl.BlockSpec((None, tile_n, o_pad), lambda p, i, k: (p, i, 0)),
                pl.BlockSpec((None, tile_n, 1), lambda p, i, k: (p, i, 0)),
            ],
            scratch_shapes=[pltpu.VMEM((tile_n, f_pad), f32)],
        ),
        compiler_params=pltpu.CompilerParams(
            dimension_semantics=("parallel", "parallel", "arbitrary"),
            vmem_limit_bytes=64 * 1024 * 1024),
        cost_estimate=cost1,
    )(h_cat, adj_pi, w_rot, bias, w1, b1, w2)

    # ---- per-path softmax over the node-mean score (P scalars, plain JAX) --
    w_mean = jnp.mean(score[:, :n, 0], axis=1)                  # (P,)
    beta = jax.nn.softmax(w_mean)
    beta_b = jnp.broadcast_to(beta[:, None, None], (p_paths, 1, o_pad))

    cost2 = pl.CostEstimate(
        flops=2 * p_paths * n_pad * o_pad,
        transcendentals=0,
        bytes_accessed=(p_paths + 1) * n_pad * o_pad * 4)

    out = pl.pallas_call(
        functools.partial(_weighted_sum_kernel, p_paths),
        out_shape=jax.ShapeDtypeStruct((n_pad, o_pad), f32),
        grid_spec=pltpu.PrefetchScalarGridSpec(
            num_scalar_prefetch=0,
            grid=(n_tiles,),
            in_specs=[
                pl.BlockSpec((p_paths, 1, o_pad), lambda i: (0, 0, 0)),
                pl.BlockSpec((p_paths, tile_n, o_pad), lambda i: (0, i, 0)),
            ],
            out_specs=pl.BlockSpec((tile_n, o_pad), lambda i: (i, 0)),
        ),
        compiler_params=pltpu.CompilerParams(
            dimension_semantics=("parallel",),
            vmem_limit_bytes=64 * 1024 * 1024),
        cost_estimate=cost2,
    )(beta_b, z)

    return out[:n, :o]


# ---------------------------------------------------------------------------
# Pure-JAX reference mirroring the PyTorch forward exactly.
# ---------------------------------------------------------------------------
def han_layer_reference(node_emb, edge_emb, adjs, paths, tag,
                        gin_w, gin_b, sem_w1, sem_b1, sem_w2):
    n, f = node_emb.shape
    r1, r2 = jnp.split(edge_emb, 2, axis=-1)
    norm = jnp.maximum(jnp.sqrt(r1 * r1 + r2 * r2), 1e-12)
    ra, rb = r1 / norm, r2 / norm
    h = node_emb.reshape(n, f // 2, 2)
    embs = []
    for i, pth in enumerate(paths):
        t1, t2 = h[:, :, 0], h[:, :, 1]
        if tag == 'in':
            for e in pth:
                t1 = t1 * ra[e - 1] - t2 * rb[e - 1]
                t2 = t1 * rb[e - 1] + t2 * ra[e - 1]
        else:
            for e in reversed(pth):
                t1 = t1 * ra[e - 1] + t2 * rb[e - 1]
                t2 = t2 * ra[e - 1] - t1 * rb[e - 1]
        h_new = jnp.concatenate([t1, t2], axis=-1)
        agg = h_new + adjs[i] @ h_new
        lin = agg @ gin_w[i] + gin_b[i]
        embs.append(jnp.where(lin > 0, lin, jnp.exp(lin) - 1.0))
    z = jnp.stack(embs, axis=1)                                 # (N, P, O)
    proj = jnp.tanh(jnp.einsum('npo,oh->nph', z, sem_w1) + sem_b1[0])
    w = jnp.sum(proj * sem_w2[0], axis=-1, keepdims=True)       # (N, P, 1)
    beta = jax.nn.softmax(w.mean(0), axis=0)                    # (P, 1)
    return jnp.sum(beta[None] * z, axis=1)


if __name__ == "__main__":
    key = jax.random.PRNGKey(0)
    num_paths = 3
    n_nodes = 272          # forces multi-tile dst/src reduction + row padding
    in_size = 48           # packed [t1 | t2] -> padded to 128 lanes
    out_size = 96          # padded to 128 lanes
    hidden = out_size // 2
    num_etypes = 5
    paths = [[1, 2], [3, 4, 1], [5]]

    ks = jax.random.split(key, 8)
    node_emb = jax.random.normal(ks[0], (n_nodes, in_size), jnp.float32)
    edge_emb = jax.random.normal(ks[1], (num_etypes, in_size), jnp.float32)
    # TODO(synk): DGL graph objects have no Pallas equivalent; graphs are
    # represented as dense adjacency matrices (A[dst, src] = 1 per edge).
    adjs = (jax.random.uniform(ks[2], (num_paths, n_nodes, n_nodes)) < 0.15
            ).astype(jnp.float32)
    gin_w = jax.random.normal(ks[3], (num_paths, in_size, out_size),
                              jnp.float32) * 0.1
    gin_b = jax.random.normal(ks[4], (num_paths, out_size), jnp.float32) * 0.1
    sem_w1 = jax.random.normal(ks[5], (out_size, hidden), jnp.float32) * 0.1
    sem_b1 = jax.random.normal(ks[6], (1, hidden), jnp.float32) * 0.1
    sem_w2 = jax.random.normal(ks[7], (1, hidden), jnp.float32) * 0.1

    # (tag, bf16-MXU path, rtol, atol).  The bf16 run is checked with looser
    # tolerance since the matmul operands are rounded to bf16 (f32 accum).
    configs = (('in', False, 5e-4, 5e-4),
               ('out', False, 5e-4, 5e-4),
               ('in', True, 2e-2, 2e-1))
    for tag, use_bf16, rtol, atol in configs:
        out = han_layer_forward(node_emb, edge_emb, adjs, paths, tag,
                                gin_w, gin_b, sem_w1, sem_b1, sem_w2,
                                use_bf16_matmul=use_bf16)
        out = jax.block_until_ready(out)
        ref = han_layer_reference(node_emb, edge_emb, adjs, paths, tag,
                                  gin_w, gin_b, sem_w1, sem_b1, sem_w2)
        np.testing.assert_allclose(np.asarray(out), np.asarray(ref),
                                   rtol=rtol, atol=atol)

    print("KERNEL_OK")
</pallas_src>

<mosaic_0001>
module attributes {stable_mosaic.version = 11 : i64} {
  func.func @_gin_kernel(%arg0: i32, %arg1: i32, %arg2: i32, %arg3: memref<128x128xf32, #tpu.memory_space<vmem>>, %arg4: memref<1x128x128xbf16, #tpu.memory_space<vmem>>, %arg5: memref<1x128x128xf32, #tpu.memory_space<vmem>>, %arg6: memref<1x1x128xf32, #tpu.memory_space<vmem>>, %arg7: memref<128x128xf32, #tpu.memory_space<vmem>>, %arg8: memref<1x128xf32, #tpu.memory_space<vmem>>, %arg9: memref<1x128xf32, #tpu.memory_space<vmem>>, %arg10: memref<1x128x128xf32, #tpu.memory_space<vmem>>, %arg11: memref<1x128x1xf32, #tpu.memory_space<vmem>>, %arg12: memref<128x128xf32, #tpu.memory_space<vmem>>) attributes {dimension_semantics = [#tpu.dimension_semantics<parallel>, #tpu.dimension_semantics<parallel>, #tpu.dimension_semantics<arbitrary>], iteration_bounds = array<i64: 3, 3, 3>, scalar_prefetch = 0 : i64, scratch_operands = 1 : i64, tpu.core_type = #tpu.core_type<tc>, window_params = [{transform_indices = @transform_0, window_bounds = array<i64: 128, 128>}, {transform_indices = @transform_1, window_bounds = array<i64: 1, 128, 128>}, {transform_indices = @transform_2, window_bounds = array<i64: 1, 128, 128>}, {transform_indices = @transform_3, window_bounds = array<i64: 1, 1, 128>}, {pipeline_mode = #tpu.pipeline_mode<synchronous>, transform_indices = @transform_4, window_bounds = array<i64: 128, 128>}, {pipeline_mode = #tpu.pipeline_mode<synchronous>, transform_indices = @transform_5, window_bounds = array<i64: 1, 128>}, {pipeline_mode = #tpu.pipeline_mode<synchronous>, transform_indices = @transform_6, window_bounds = array<i64: 1, 128>}, {transform_indices = @transform_7, window_bounds = array<i64: 1, 128, 128>}, {transform_indices = @transform_8, window_bounds = array<i64: 1, 128, 1>}]} {
    %c0_i32 = arith.constant 0 : i32
    %0 = arith.cmpi eq, %arg2, %c0_i32 : i32
    %1 = arith.extui %0 : i1 to i32
    %c0_i32_0 = arith.constant 0 : i32
    %2 = arith.cmpi ne, %1, %c0_i32_0 : i32
    scf.if %2 {
      %cst_10 = arith.constant 0.000000e+00 : f32
      %13 = vector.broadcast %cst_10 : f32 to vector<128x128xf32>
      %c0_11 = arith.constant 0 : index
      %c0_12 = arith.constant 0 : index
      %14 = vector.load %arg12[%c0_11, %c0_12] : memref<128x128xf32, #tpu.memory_space<vmem>>, vector<128x128xf32>
      tpu.vector_store %arg12[%c0_11, %c0_12], %13 {strides = array<i32>} : memref<128x128xf32, #tpu.memory_space<vmem>>, vector<128x128xf32>,
    } else {
    }
    %c0 = arith.constant 0 : index
    %c0_1 = arith.constant 0 : index
    %3 = vector.load %arg12[%c0, %c0_1] : memref<128x128xf32, #tpu.memory_space<vmem>>, vector<128x128xf32>
    %c0_2 = arith.constant 0 : index
    %c0_3 = arith.constant 0 : index
    %c0_4 = arith.constant 0 : index
    %4 = vector.load %arg4[%c0_2, %c0_3, %c0_4] : memref<1x128x128xbf16, #tpu.memory_space<vmem>>, vector<1x128x128xbf16>
    %5 = vector.shape_cast %4 : vector<1x128x128xbf16> to vector<128x128xbf16>
    %c0_5 = arith.constant 0 : index
    %c0_6 = arith.constant 0 : index
    %6 = vector.load %arg3[%c0_5, %c0_6] : memref<128x128xf32, #tpu.memory_space<vmem>>, vector<128x128xf32>
    %cst = arith.constant dense<0.000000e+00> : vector<128x128xf32>
    %7 = tpu.matmul %5, %6, %cst {dimension_numbers = #tpu.dot_dimension_numbers<[1], [0], [0], [1], [0, 0, 1, 1], [], []>} : vector<128x128xbf16>, vector<128x128xf32>, vector<128x128xf32> -> vector<128x128xf32>
    %8 = arith.addf %3, %7 : vector<128x128xf32>
    %c0_7 = arith.constant 0 : index
    %c0_8 = arith.constant 0 : index
    %9 = vector.load %arg12[%c0_7, %c0_8] : memref<128x128xf32, #tpu.memory_space<vmem>>, vector<128x128xf32>
    tpu.vector_store %arg12[%c0_7, %c0_8], %8 {strides = array<i32>} : memref<128x128xf32, #tpu.memory_space<vmem>>, vector<128x128xf32>,
    %c2_i32 = arith.constant 2 : i32
    %10 = arith.cmpi eq, %arg2, %c2_i32 : i32
    %11 = arith.extui %10 : i1 to i32
    %c0_i32_9 = arith.constant 0 : i32
    %12 = arith.cmpi ne, %11, %c0_i32_9 : i32
    scf.if %12 {
      %c0_10 = arith.constant 0 : index
      %c0_11 = arith.constant 0 : index
      %13 = vector.load %arg12[%c0_10, %c0_11] : memref<128x128xf32, #tpu.memory_space<vmem>>, vector<128x128xf32>
      %c0_12 = arith.constant 0 : index
      %c0_13 = arith.constant 0 : index
      %c0_14 = arith.constant 0 : index
      %14 = vector.load %arg5[%c0_12, %c0_13, %c0_14] : memref<1x128x128xf32, #tpu.memory_space<vmem>>, vector<1x128x128xf32>
      %15 = vector.shape_cast %14 : vector<1x128x128xf32> to vector<128x128xf32>
      %cst_15 = arith.constant dense<0.000000e+00> : vector<128x128xf32>
      %16 = tpu.matmul %13, %15, %cst_15 {dimension_numbers = #tpu.dot_dimension_numbers<[1], [0], [0], [1], [0, 0, 1, 1], [], []>} : vector<128x128xf32>, vector<128x128xf32>, vector<128x128xf32> -> vector<128x128xf32>
      %c0_16 = arith.constant 0 : index
      %c0_17 = arith.constant 0 : index
      %c0_18 = arith.constant 0 : index
      %17 = vector.load %arg6[%c0_16, %c0_17, %c0_18] : memref<1x1x128xf32, #tpu.memory_space<vmem>>, vector<1x1x128xf32>
      %18 = vector.shape_cast %17 : vector<1x1x128xf32> to vector<1x128xf32>
      %19 = vector.broadcast %18 : vector<1x128xf32> to vector<128x128xf32>
      %20 = arith.addf %16, %19 : vector<128x128xf32>
      %cst_19 = arith.constant 0.000000e+00 : f32
      %21 = vector.broadcast %cst_19 : f32 to vector<128x128xf32>
      %22 = arith.cmpf ogt, %20, %21 : vector<128x128xf32>
      %23 = math.exp %20 : vector<128x128xf32>
      %cst_20 = arith.constant 1.000000e+00 : f32
      %24 = vector.broadcast %cst_20 : f32 to vector<128x128xf32>
      %25 = arith.subf %23, %24 : vector<128x128xf32>
      %26 = arith.select %22, %20, %25 : vector<128x128xi1>, vector<128x128xf32>
      %c0_21 = arith.constant 0 : index
      %c0_22 = arith.constant 0 : index
      %c0_23 = arith.constant 0 : index
      %27 = vector.load %arg10[%c0_21, %c0_22, %c0_23] : memref<1x128x128xf32, #tpu.memory_space<vmem>>, vector<1x128x128xf32>
      %28 = vector.shape_cast %27 : vector<1x128x128xf32> to vector<128x128xf32>
      %29 = vector.shape_cast %26 : vector<128x128xf32> to vector<1x128x128xf32>
      tpu.vector_store %arg10[%c0_21, %c0_22, %c0_23], %29 {strides = array<i32>} : memref<1x128x128xf32, #tpu.memory_space<vmem>>, vector<1x128x128xf32>,
      %c0_24 = arith.constant 0 : index
      %c0_25 = arith.constant 0 : index
      %30 = vector.load %arg7[%c0_24, %c0_25] : memref<128x128xf32, #tpu.memory_space<vmem>>, vector<128x128xf32>
      %cst_26 = arith.constant dense<0.000000e+00> : vector<128x128xf32>
      %31 = tpu.matmul %26, %30, %cst_26 {dimension_numbers = #tpu.dot_dimension_numbers<[1], [0], [0], [1], [0, 0, 1, 1], [], []>} : vector<128x128xf32>, vector<128x128xf32>, vector<128x128xf32> -> vector<128x128xf32>
      %c0_27 = arith.constant 0 : index
      %c0_28 = arith.constant 0 : index
      %32 = vector.load %arg8[%c0_27, %c0_28] : memref<1x128xf32, #tpu.memory_space<vmem>>, vector<1x128xf32>
      %33 = vector.broadcast %32 : vector<1x128xf32> to vector<128x128xf32>
      %34 = arith.addf %31, %33 : vector<128x128xf32>
      %35 = math.tanh %34 : vector<128x128xf32>
      %c0_29 = arith.constant 0 : index
      %c0_30 = arith.constant 0 : index
      %36 = vector.load %arg9[%c0_29, %c0_30] : memref<1x128xf32, #tpu.memory_space<vmem>>, vector<1x128xf32>
      %37 = vector.broadcast %36 : vector<1x128xf32> to vector<128x128xf32>
      %38 = arith.mulf %35, %37 : vector<128x128xf32>
      %cst_31 = arith.constant dense<0.000000e+00> : vector<128xf32>
      %39 = vector.multi_reduction <add>, %38, %cst_31 [1] : vector<128x128xf32> to vector<128xf32>
      %40 = vector.shape_cast %39 : vector<128xf32> to vector<128x1xf32>
      %c0_32 = arith.constant 0 : index
      %c0_33 = arith.constant 0 : index
      %c0_34 = arith.constant 0 : index
      %41 = vector.load %arg11[%c0_32, %c0_33, %c0_34] : memref<1x128x1xf32, #tpu.memory_space<vmem>>, vector<1x128x1xf32>
      %42 = vector.shape_cast %41 : vector<1x128x1xf32> to vector<128x1xf32>
      %43 = vector.shape_cast %40 : vector<128x1xf32> to vector<1x128x1xf32>
      tpu.vector_store %arg11[%c0_32, %c0_33, %c0_34], %43 {strides = array<i32>} : memref<1x128x1xf32, #tpu.memory_space<vmem>>, vector<1x128x1xf32>,
    } else {
    }
    return
  }
  func.func @transform_0(%arg0: i32, %arg1: i32, %arg2: i32) -> (i32, i32) {
    %c0_i32 = arith.constant 0 : i32
    %c0_i32_0 = arith.constant 0 : i32
    return %arg2, %c0_i32 : i32, i32
  }
  func.func @transform_1(%arg0: i32, %arg1: i32, %arg2: i32) -> (i32, i32, i32) {
    %c0_i32 = arith.constant 0 : i32
    return %arg0, %arg1, %arg2 : i32, i32, i32
  }
  func.func @transform_2(%arg0: i32, %arg1: i32, %arg2: i32) -> (i32, i32, i32) {
    %c0_i32 = arith.constant 0 : i32
    %c0_i32_0 = arith.constant 0 : i32
    %c0_i32_1 = arith.constant 0 : i32
    return %arg0, %c0_i32, %c0_i32_0 : i32, i32, i32
  }
  func.func @transform_3(%arg0: i32, %arg1: i32, %arg2: i32) -> (i32, i32, i32) {
    %c0_i32 = arith.constant 0 : i32
    %c0_i32_0 = arith.constant 0 : i32
    %c0_i32_1 = arith.constant 0 : i32
    return %arg0, %c0_i32, %c0_i32_0 : i32, i32, i32
  }
  func.func @transform_4(%arg0: i32, %arg1: i32, %arg2: i32) -> (i32, i32) {
    %c0_i32 = arith.constant 0 : i32
    %c0_i32_0 = arith.constant 0 : i32
    %c0_i32_1 = arith.constant 0 : i32
    return %c0_i32, %c0_i32_0 : i32, i32
  }
  func.func @transform_5(%arg0: i32, %arg1: i32, %arg2: i32) -> (i32, i32) {
    %c0_i32 = arith.constant 0 : i32
    %c0_i32_0 = arith.constant 0 : i32
    %c0_i32_1 = arith.constant 0 : i32
    return %c0_i32, %c0_i32_0 : i32, i32
  }
  func.func @transform_6(%arg0: i32, %arg1: i32, %arg2: i32) -> (i32, i32) {
    %c0_i32 = arith.constant 0 : i32
    %c0_i32_0 = arith.constant 0 : i32
    %c0_i32_1 = arith.constant 0 : i32
    return %c0_i32, %c0_i32_0 : i32, i32
  }
  func.func @transform_7(%arg0: i32, %arg1: i32, %arg2: i32) -> (i32, i32, i32) {
    %c0_i32 = arith.constant 0 : i32
    %c0_i32_0 = arith.constant 0 : i32
    return %arg0, %arg1, %c0_i32 : i32, i32, i32
  }
  func.func @transform_8(%arg0: i32, %arg1: i32, %arg2: i32) -> (i32, i32, i32) {
    %c0_i32 = arith.constant 0 : i32
    %c0_i32_0 = arith.constant 0 : i32
    return %arg0, %arg1, %c0_i32 : i32, i32, i32
  }
}

</mosaic_0001>

<llo_original>
// kernel: tpu_custom_call.1
$region0: #{tpu_custom_call.1}
  #allocation0 [shape = 'u32[]', space=smem, size = 0x4, offset = 0x4, fixed_abs, tag = 'smem constant byte address 0x4 - core index']
  #allocation1 [shape = 'u32[144,128]{1,0:T(1,128)}', space=vmem, size = 0x12000, scoped, tag = 'internal scratch']
  #allocation2 [shape = 'f32[128,128]{1,0:T(8,128)}', space=vmem, size = 0x10000, scoped, tag = 'scratch operand']
  %s0 = inlined_call_operand.hbm [shape: f32[384,128], index: 0, kind: input, shape index: {}]
  %s1 = inlined_call_operand.hbm [shape: bf16[3,384,384], index: 1, kind: input, shape index: {}]
  %s2 = inlined_call_operand.hbm [shape: f32[3,128,128], index: 2, kind: input, shape index: {}]
  %s3 = inlined_call_operand.hbm [shape: f32[3,1,128], index: 3, kind: input, shape index: {}]
  %s4 = inlined_call_operand.hbm [shape: f32[128,128], index: 4, kind: input, shape index: {}]
  %s5 = inlined_call_operand.hbm [shape: f32[1,128], index: 5, kind: input, shape index: {}]
  %s6 = inlined_call_operand.hbm [shape: f32[1,128], index: 6, kind: input, shape index: {}]
  %s7 = inlined_call_operand.hbm [shape: f32[3,384,128], index: 7, kind: output, shape index: {0}]
  %s8 = inlined_call_operand.hbm [shape: f32[3,384,1], index: 8, kind: output, shape index: {1}]
  %9 = xla_tuple %s7, %s8
  %s10 = sld [smem:[#allocation0]]
  $region105: #{tpu_custom_call.1} parent=0
    _
  %s12 = ssub.s32 1, %s10
  %s13 = scalar_select 0, %s12, %s10
  $region1: #{tpu_custom_call.1} parent=0
    #allocation3 [shape = 'u8[131072]{0}', space=vmem, size = 0x20000, scoped, tag = 'input window, operand 0']
    #allocation4 [shape = 's32[2]{0}', space=sflag, size = 0x8, scoped, tag = 'scoped memory for tpu_custom_call.1']
    #allocation5 [shape = 's32[2]{0}', space=sflag, size = 0x8, scoped, tag = 'scoped memory for tpu_custom_call.1']
    #allocation6 [shape = 'u8[65536]{0}', space=vmem, size = 0x10000, scoped, tag = 'input window, operand 1']
    #allocation7 [shape = 's32[2]{0}', space=sflag, size = 0x8, scoped, tag = 'scoped memory for tpu_custom_call.1']
    #allocation8 [shape = 'u8[131072]{0}', space=vmem, size = 0x20000, scoped, tag = 'input window, operand 2']
    #allocation9 [shape = 'u8[1024]{0}', space=vmem, size = 0x400, scoped, tag = 'input window, operand 3']
    #allocation10 [shape = 's32[2]{0}', space=sflag, size = 0x8, scoped, tag = 'scoped memory for tpu_custom_call.1']
    #allocation11 [shape = 'u8[65536]{0}', space=vmem, size = 0x10000, scoped, tag = 'input window, operand 4, single buffered']
    #allocation12 [shape = 'u8[512]{0}', space=vmem, size = 0x400, scoped, tag = 'input window, operand 5, single buffered']
    #allocation13 [shape = 's32[1]{0}', space=sflag, size = 0x4, scoped, tag = 'scoped memory for tpu_custom_call.1']
    #allocation14 [shape = 'u8[512]{0}', space=vmem, size = 0x400, scoped, tag = 'input window, operand 6, single buffered']
    #allocation15 [shape = 'u8[131072]{0}', space=vmem, size = 0x20000, scoped, tag = 'output window, operand 0']
    #allocation16 [shape = 'u8[131072]{0}', space=vmem, size = 0x20000, scoped, tag = 'output window, operand 1']
    #allocation17 [shape = 's32[2]{0}', space=sflag, size = 0x8, scoped, tag = 'scoped memory for tpu_custom_call.1']
    %14 = vsyncpa [#allocation4], 0
    %s15 = scalar_lea.sflag [#allocation4], 1
    %16 = vsyncpa %s15, 0
    %17 = vsyncpa [#allocation7], 0
    %s18 = scalar_lea.sflag [#allocation7], 1
    %19 = vsyncpa %s18, 0
    %20 = vsyncpa [#allocation10], 0
    %s21 = scalar_lea.sflag [#allocation10], 1
    %22 = vsyncpa %s21, 0
    %23 = vsyncpa [#allocation13], 0
    %24 = vsyncpa [#allocation5], 0
    %s25 = scalar_lea.sflag [#allocation5], 1
    %26 = vsyncpa %s25, 0
    %27 = vsyncpa [#allocation17], 0
    %s28 = scalar_lea.sflag [#allocation17], 1
    %29 = vsyncpa %s28, 0
    loop: start=0, step=1, limit=29
    $region2: #{tpu_custom_call.1} parent=1 // loop_pre_header
      _
    $region3: #{tpu_custom_call.1} parent=1 // loop_header
      %s31 = sphi 0, %s35
      %p32 = scmp.ge.s32.totalorder %s31, 29
      %s38 = sphi 0, %s57
      %s39 = sphi 0, %s53
      %s40 = sphi 0, %s49
      %s41 = sphi 0, %s38
      %s42 = sphi 0, %s39
      %s43 = sphi 0, %s40
      %s44 = sphi 0, %s41
      %s45 = sphi 0, %s42
      %s46 = sphi 0, %s43
      %s60 = sphi 0, %s62
      %s63 = sphi 0, %s60
      %s64 = sphi 0, %s63
      %s80 = sphi 0, %s64
      %s90 = sphi 0, %s92
      %s93 = sphi 0, %s90
      %s94 = sphi 0, %s93
      %s110 = sphi 0, %s94
      %s116 = sphi 0, %s118
      %s119 = sphi 0, %s116
      %s120 = sphi 0, %s119
      %s136 = sphi 0, %s120
      %s142 = sphi 0, %s144
      %s145 = sphi 0, %s142
      %s146 = sphi 0, %s145
      %s162 = sphi 0, %s146
      %s166 = sphi 0, %s166
      %s168 = sphi 0, %s166
      %s169 = sphi 0, %s168
      %s183 = sphi 0, %s169
      %s187 = sphi 0, %s187
      %s189 = sphi 0, %s187
      %s190 = sphi 0, %s189
      %s204 = sphi 0, %s190
      %s208 = sphi 0, %s208
      %s210 = sphi 0, %s208
      %s211 = sphi 0, %s210
      %s225 = sphi 0, %s211
      %s233 = sphi 0, %s235
      %s236 = sphi 0, %s233
      %s237 = sphi 0, %s236
      %s253 = sphi 0, %s237
      %s261 = sphi 0, %s263
      %s264 = sphi 0, %s261
      %s265 = sphi 0, %s264
      %s281 = sphi 0, %s265
    $region4: #{tpu_custom_call.1} parent=1 // loop_header_branch
      %34 = sbr.rel (%p32) target = $region8
    $region5: #{tpu_custom_call.1} parent=1 // loop_body
      %s36 = ssub.s32 %s31, 1
      %s37 = ssub.s32 %s31, 2
      %s47 = sadd.s32 1, %s40
      %p48 = scmp.ge.s32.totalorder %s47, 3
      %s49 = scalar_select %p48, 0, %s47
      %s50 = sadd.s32 1, %s39
      %s51 = scalar_select %p48, %s50, %s39
      %p52 = scmp.ge.s32.totalorder %s51, 3
      %s53 = scalar_select %p52, 0, %s51
      %s54 = sadd.s32 1, %s38
      %s55 = scalar_select %p52, %s54, %s38
      %p56 = scmp.ge.s32.totalorder %s55, 3
      %s57 = scalar_select %p56, 0, %s55
      %s58 = ssub.s32 %s40, %s49
      %p59 = scmp.eq.s32.totalorder %s58, 0
      %s61 = sadd.s32 %s60, 1
      %s62 = scalar_select %p59, %s60, %s61
      %p65 = pneg %p59
      %p66 = scmp.eq.s32.totalorder %s31, 26
      %p67 = por %p65, %p66
      %p68 = scmp.ne.s32.totalorder %s60, %s63
      %p69 = scmp.eq.s32.totalorder %s31, 0
      %p70 = por %p68, %p69
      %p71 = scmp.ne.s32.totalorder %s60, %s63
      %p72 = scmp.eq.s32.totalorder %s36, 26
      %p73 = por %p71, %p72
      %p74 = scmp.ne.s32.totalorder %s63, %s64
      %p75 = scmp.eq.s32.totalorder %s36, 0
      %p76 = por %p74, %p75
      %p77 = scmp.ne.s32.totalorder %s63, %s64
      %p78 = scmp.eq.s32.totalorder %s37, 26
      %p79 = por %p77, %p78
      %p81 = scmp.ne.s32.totalorder %s64, %s80
      %p82 = scmp.eq.s32.totalorder %s37, 0
      %p83 = por %p81, %p82
      %s84 = ssub.s32 %s38, %s57
      %s85 = ssub.s32 %s39, %s53
      %s86 = sor.u32 %s84, %s85
      %s87 = ssub.s32 %s40, %s49
      %s88 = sor.u32 %s86, %s87
      %p89 = scmp.eq.s32.totalorder %s88, 0
      %s91 = sadd.s32 %s90, 1
      %s92 = scalar_select %p89, %s90, %s91
      %p95 = pneg %p89
      %p96 = scmp.eq.s32.totalorder %s31, 26
      %p97 = por %p95, %p96
      %p98 = scmp.ne.s32.totalorder %s90, %s93
      %p99 = scmp.eq.s32.totalorder %s31, 0
      %p100 = por %p98, %p99
      %p101 = scmp.ne.s32.totalorder %s90, %s93
      %p102 = scmp.eq.s32.totalorder %s36, 26
      %p103 = por %p101, %p102
      %p104 = scmp.ne.s32.totalorder %s93, %s94
      %p105 = scmp.eq.s32.totalorder %s36, 0
      %p106 = por %p104, %p105
      %p107 = scmp.ne.s32.totalorder %s93, %s94
      %p108 = scmp.eq.s32.totalorder %s37, 26
      %p109 = por %p107, %p108
      %p111 = scmp.ne.s32.totalorder %s94, %s110
      %p112 = scmp.eq.s32.totalorder %s37, 0
      %p113 = por %p111, %p112
      %s114 = ssub.s32 %s38, %s57
      %p115 = scmp.eq.s32.totalorder %s114, 0
      %s117 = sadd.s32 %s116, 1
      %s118 = scalar_select %p115, %s116, %s117
      %p121 = pneg %p115
      %p122 = scmp.eq.s32.totalorder %s31, 26
      %p123 = por %p121, %p122
      %p124 = scmp.ne.s32.totalorder %s116, %s119
      %p125 = scmp.eq.s32.totalorder %s31, 0
      %p126 = por %p124, %p125
      %p127 = scmp.ne.s32.totalorder %s116, %s119
      %p128 = scmp.eq.s32.totalorder %s36, 26
      %p129 = por %p127, %p128
      %p130 = scmp.ne.s32.totalorder %s119, %s120
      %p131 = scmp.eq.s32.totalorder %s36, 0
      %p132 = por %p130, %p131
      %p133 = scmp.ne.s32.totalorder %s119, %s120
      %p134 = scmp.eq.s32.totalorder %s37, 26
      %p135 = por %p133, %p134
      %p137 = scmp.ne.s32.totalorder %s120, %s136
      %p138 = scmp.eq.s32.totalorder %s37, 0
      %p139 = por %p137, %p138
      %s140 = ssub.s32 %s38, %s57
      %p141 = scmp.eq.s32.totalorder %s140, 0
      %s143 = sadd.s32 %s142, 1
      %s144 = scalar_select %p141, %s142, %s143
      %p147 = pneg %p141
      %p148 = scmp.eq.s32.totalorder %s31, 26
      %p149 = por %p147, %p148
      %p150 = scmp.ne.s32.totalorder %s142, %s145
      %p151 = scmp.eq.s32.totalorder %s31, 0
      %p152 = por %p150, %p151
      %p153 = scmp.ne.s32.totalorder %s142, %s145
      %p154 = scmp.eq.s32.totalorder %s36, 26
      %p155 = por %p153, %p154
      %p156 = scmp.ne.s32.totalorder %s145, %s146
      %p157 = scmp.eq.s32.totalorder %s36, 0
      %p158 = por %p156, %p157
      %p159 = scmp.ne.s32.totalorder %s145, %s146
      %p160 = scmp.eq.s32.totalorder %s37, 26
      %p161 = por %p159, %p160
      %p163 = scmp.ne.s32.totalorder %s146, %s162
      %p164 = scmp.eq.s32.totalorder %s37, 0
      %p165 = por %p163, %p164
      %s167 = sadd.s32 %s166, 1
      %p170 = scmp.eq.s32.totalorder %s31, 26
      %p171 = scmp.ne.s32.totalorder %s166, %s168
      %p172 = scmp.eq.s32.totalorder %s31, 0
      %p173 = por %p171, %p172
      %p174 = scmp.ne.s32.totalorder %s166, %s168
      %p175 = scmp.eq.s32.totalorder %s36, 26
      %p176 = por %p174, %p175
      %p177 = scmp.ne.s32.totalorder %s168, %s169
      %p178 = scmp.eq.s32.totalorder %s36, 0
      %p179 = por %p177, %p178
      %p180 = scmp.ne.s32.totalorder %s168, %s169
      %p181 = scmp.eq.s32.totalorder %s37, 26
      %p182 = por %p180, %p181
      %p184 = scmp.ne.s32.totalorder %s169, %s183
      %p185 = scmp.eq.s32.totalorder %s37, 0
      %p186 = por %p184, %p185
      %s188 = sadd.s32 %s187, 1
      %p191 = scmp.eq.s32.totalorder %s31, 26
      %p192 = scmp.ne.s32.totalorder %s187, %s189
      %p193 = scmp.eq.s32.totalorder %s31, 0
      %p194 = por %p192, %p193
      %p195 = scmp.ne.s32.totalorder %s187, %s189
      %p196 = scmp.eq.s32.totalorder %s36, 26
      %p197 = por %p195, %p196
      %p198 = scmp.ne.s32.totalorder %s189, %s190
      %p199 = scmp.eq.s32.totalorder %s36, 0
      %p200 = por %p198, %p199
      %p201 = scmp.ne.s32.totalorder %s189, %s190
      %p202 = scmp.eq.s32.totalorder %s37, 26
      %p203 = por %p201, %p202
      %p205 = scmp.ne.s32.totalorder %s190, %s204
      %p206 = scmp.eq.s32.totalorder %s37, 0
      %p207 = por %p205, %p206
      %s209 = sadd.s32 %s208, 1
      %p212 = scmp.eq.s32.totalorder %s31, 26
      %p213 = scmp.ne.s32.totalorder %s208, %s210
      %p214 = scmp.eq.s32.totalorder %s31, 0
      %p215 = por %p213, %p214
      %p216 = scmp.ne.s32.totalorder %s208, %s210
      %p217 = scmp.eq.s32.totalorder %s36, 26
      %p218 = por %p216, %p217
      %p219 = scmp.ne.s32.totalorder %s210, %s211
      %p220 = scmp.eq.s32.totalorder %s36, 0
      %p221 = por %p219, %p220
      %p222 = scmp.ne.s32.totalorder %s210, %s211
      %p223 = scmp.eq.s32.totalorder %s37, 26
      %p224 = por %p222, %p223
      %p226 = scmp.ne.s32.totalorder %s211, %s225
      %p227 = scmp.eq.s32.totalorder %s37, 0
      %p228 = por %p226, %p227
      %s229 = ssub.s32 %s38, %s57
      %s230 = ssub.s32 %s39, %s53
      %s231 = sor.u32 %s229, %s230
      %p232 = scmp.eq.s32.totalorder %s231, 0
      %s234 = sadd.s32 %s233, 1
      %s235 = scalar_select %p232, %s233, %s234
      %p238 = pneg %p232
      %p239 = scmp.eq.s32.totalorder %s31, 26
      %p240 = por %p238, %p239
      %p241 = scmp.ne.s32.totalorder %s233, %s236
      %p242 = scmp.eq.s32.totalorder %s31, 0
      %p243 = por %p241, %p242
      %p244 = scmp.ne.s32.totalorder %s233, %s236
      %p245 = scmp.eq.s32.totalorder %s36, 26
      %p246 = por %p244, %p245
      %p247 = scmp.ne.s32.totalorder %s236, %s237
      %p248 = scmp.eq.s32.totalorder %s36, 0
      %p249 = por %p247, %p248
      %p250 = scmp.ne.s32.totalorder %s236, %s237
      %p251 = scmp.eq.s32.totalorder %s37, 26
      %p252 = por %p250, %p251
      %p254 = scmp.ne.s32.totalorder %s237, %s253
      %p255 = scmp.eq.s32.totalorder %s37, 0
      %p256 = por %p254, %p255
      %s257 = ssub.s32 %s38, %s57
      %s258 = ssub.s32 %s39, %s53
      %s259 = sor.u32 %s257, %s258
      %p260 = scmp.eq.s32.totalorder %s259, 0
      %s262 = sadd.s32 %s261, 1
      %s263 = scalar_select %p260, %s261, %s262
      %p266 = pneg %p260
      %p267 = scmp.eq.s32.totalorder %s31, 26
      %p268 = por %p266, %p267
      %p269 = scmp.ne.s32.totalorder %s261, %s264
      %p270 = scmp.eq.s32.totalorder %s31, 0
      %p271 = por %p269, %p270
      %p272 = scmp.ne.s32.totalorder %s261, %s264
      %p273 = scmp.eq.s32.totalorder %s36, 26
      %p274 = por %p272, %p273
      %p275 = scmp.ne.s32.totalorder %s264, %s265
      %p276 = scmp.eq.s32.totalorder %s36, 0
      %p277 = por %p275, %p276
      %p278 = scmp.ne.s32.totalorder %s264, %s265
      %p279 = scmp.eq.s32.totalorder %s37, 26
      %p280 = por %p278, %p279
      %p282 = scmp.ne.s32.totalorder %s265, %s281
      %p283 = scmp.eq.s32.totalorder %s37, 0
      %p284 = por %p282, %p283
      %p285 = scmp.le.s32.totalorder 1, %s31
      %p286 = scmp.lt.s32.totalorder %s31, 28
      %p287 = pnand %p285, %p286
      %p288 = pneg %p287
      // Predicated region
      $region9: #{tpu_custom_call.1} parent=5 // pred_check
        _
      $region10: #{tpu_custom_call.1} parent=5 // pred_check_branch
        %290 = sbr.rel (%p287) target = $region12
      $region11: #{tpu_custom_call.1} parent=5 // pred_region
        %s291 = ssub.s32 %s31, 1
        // Predicated region
        $region13: #{tpu_custom_call.1} parent=11 // pred_check
          %p292 = pneg %p179
        $region14: #{tpu_custom_call.1} parent=11 // pred_check_branch
          %294 = sbr.rel (%p292) target = $region16
        $region15: #{tpu_custom_call.1} parent=11 // pred_region
          %s296 = ssub.s32 2048, 2048
          %297 = vsyncadd [#allocation10], %s296
          %s298 = sshll.u32 [#allocation11], 4
          %s299 = int_to_ptr.vmem [resolvable:$true] %s298
          %304 = dma.hbm_to_vmem [thread:$0]  %s4, 2048, %s299, [#allocation10], 128, 128, 8
        $region16: #{tpu_custom_call.1} parent=11 // pred_fallthru
          _
        // Predicated region
        $region17: #{tpu_custom_call.1} parent=11 // pred_check
          %p305 = pneg %p200
        $region18: #{tpu_custom_call.1} parent=11 // pred_check_branch
          %307 = sbr.rel (%p305) target = $region20
        $region19: #{tpu_custom_call.1} parent=11 // pred_region
          %s309 = ssub.s32 16, 16
          %310 = vsyncadd [#allocation13], %s309
          %s312 = sshll.u32 [#allocation12], 4
          %s313 = int_to_ptr.vmem [resolvable:$true] %s312
          %315 = dma.hbm_to_vmem [thread:$0]  %s5, 16, %s313, [#allocation13]
        $region20: #{tpu_custom_call.1} parent=11 // pred_fallthru
          _
        // Predicated region
        $region21: #{tpu_custom_call.1} parent=11 // pred_check
          %p316 = pneg %p221
        $region22: #{tpu_custom_call.1} parent=11 // pred_check_branch
          %318 = sbr.rel (%p316) target = $region24
        $region23: #{tpu_custom_call.1} parent=11 // pred_region
          %s320 = ssub.s32 16, 16
          %321 = vsyncadd [#allocation13], %s320
          %s323 = sshll.u32 [#allocation14], 4
          %s324 = int_to_ptr.vmem [resolvable:$true] %s323
          %326 = dma.hbm_to_vmem [thread:$0]  %s6, 16, %s324, [#allocation13]
        $region24: #{tpu_custom_call.1} parent=11 // pred_fallthru
          _
      $region12: #{tpu_custom_call.1} parent=5 // pred_fallthru
        _
      %p327 = scmp.lt.s32.totalorder %s31, 27
      // Predicated region
      $region25: #{tpu_custom_call.1} parent=5 // pred_check
        %p328 = pneg %p327
      $region26: #{tpu_custom_call.1} parent=5 // pred_check_branch
        %330 = sbr.rel (%p328) target = $region28
      $region27: #{tpu_custom_call.1} parent=5 // pred_region
        // Predicated region
        $region29: #{tpu_custom_call.1} parent=27 // pred_check
          %p331 = pneg %p70
        $region30: #{tpu_custom_call.1} parent=27 // pred_check_branch
          %333 = sbr.rel (%p331) target = $region32
        $region31: #{tpu_custom_call.1} parent=27 // pred_region
          %s334 = sand.u32 %s60, 1
          %s335 = scalar_lea.sflag [#allocation4], %s334
          %s336 = sand.u32 %s60, 1
          %s337 = smul.addr %s336, 128
          %s338 = scalar_lea.vmem [#allocation3], %s337
          %s339 = smul.u32 16, %s40
          %s341 = ssub.s32 2048, 2048
          %342 = vsyncadd %s335, %s341
          %s343 = smul.addr %s339, 128
          %s344 = scalar_lea.hbm %s0, %s343
          %s345 = sshll.u32 %s338, 4
          %s346 = int_to_ptr.vmem [resolvable:$true] %s345
          %351 = dma.hbm_to_vmem [thread:$0]  %s344, 2048, %s346, %s335, 128, 128, 8
        $region32: #{tpu_custom_call.1} parent=27 // pred_fallthru
          _
        // Predicated region
        $region33: #{tpu_custom_call.1} parent=27 // pred_check
          %p352 = pneg %p100
        $region34: #{tpu_custom_call.1} parent=27 // pred_check_branch
          %354 = sbr.rel (%p352) target = $region36
        $region35: #{tpu_custom_call.1} parent=27 // pred_region
          %s355 = sand.u32 %s31, 1
          %s356 = scalar_lea.sflag [#allocation7], %s355
          %s357 = sand.u32 %s90, 1
          %s358 = smul.addr %s357, 64
          %s359 = scalar_lea.vmem [#allocation6], %s358
          %s360 = smul.u32 16, %s39
          %s362 = ssub.s32 1024, 1024
          %363 = vsyncadd %s356, %s362
          %s364 = smul.addr %s360, 3
          %s365 = sadd.s32 %s40, %s364
          %s366 = smul.addr %s38, 144
          %s367 = sadd.s32 %s365, %s366
          %s368 = smul.addr %s367, 64
          %s369 = scalar_lea.hbm %s1, %s368
          %s370 = sshll.u32 %s359, 4
          %s371 = int_to_ptr.vmem [resolvable:$true] %s370
          %376 = dma.hbm_to_vmem [thread:$0]  %s369, 1024, %s371, %s356, 192, 64, 4
        $region36: #{tpu_custom_call.1} parent=27 // pred_fallthru
          _
        // Predicated region
        $region37: #{tpu_custom_call.1} parent=27 // pred_check
          %p377 = pneg %p126
        $region38: #{tpu_custom_call.1} parent=27 // pred_check_branch
          %379 = sbr.rel (%p377) target = $region40
        $region39: #{tpu_custom_call.1} parent=27 // pred_region
          %s380 = sand.u32 %s31, 1
          %s381 = scalar_lea.sflag [#allocation7], %s380
          %s382 = sand.u32 %s116, 1
          %s383 = smul.addr %s382, 128
          %s384 = scalar_lea.vmem [#allocation8], %s383
          %s386 = ssub.s32 2048, 2048
          %387 = vsyncadd %s381, %s386
          %s388 = smul.addr %s38, 16
          %s389 = smul.addr %s388, 128
          %s390 = scalar_lea.hbm %s2, %s389
          %s391 = sshll.u32 %s384, 4
          %s392 = int_to_ptr.vmem [resolvable:$true] %s391
          %397 = dma.hbm_to_vmem [thread:$0]  %s390, 2048, %s392, %s381, 128, 128, 8
        $region40: #{tpu_custom_call.1} parent=27 // pred_fallthru
          _
        // Predicated region
        $region41: #{tpu_custom_call.1} parent=27 // pred_check
          %p398 = pneg %p152
        $region42: #{tpu_custom_call.1} parent=27 // pred_check_branch
          %400 = sbr.rel (%p398) target = $region44
        $region43: #{tpu_custom_call.1} parent=27 // pred_region
          %s401 = sand.u32 %s31, 1
          %s402 = scalar_lea.sflag [#allocation10], %s401
          %s403 = sand.u32 %s142, 1
          %s404 = scalar_lea.vmem [#allocation9], %s403
          %s406 = ssub.s32 16, 16
          %407 = vsyncadd %s402, %s406
          %s408 = smul.addr %s38, 16
          %s409 = scalar_lea.hbm %s3, %s408
          %s411 = sshll.u32 %s404, 4
          %s412 = int_to_ptr.vmem [resolvable:$true] %s411
          %414 = dma.hbm_to_vmem [thread:$0]  %s409, 16, %s412, %s402
        $region44: #{tpu_custom_call.1} parent=27 // pred_fallthru
          _
      $region28: #{tpu_custom_call.1} parent=5 // pred_fallthru
        _
      %p415 = scmp.le.s32.totalorder 1, %s31
      %p416 = scmp.lt.s32.totalorder %s31, 28
      %p417 = pnand %p415, %p416
      %p418 = pneg %p417
      // Predicated region
      $region45: #{tpu_custom_call.1} parent=5 // pred_check
        _
      $region46: #{tpu_custom_call.1} parent=5 // pred_check_branch
        %420 = sbr.rel (%p417) target = $region48
      $region47: #{tpu_custom_call.1} parent=5 // pred_region
        %s421 = ssub.s32 %s31, 1
        %s422 = sand.u32 %s63, 1
        %s423 = scalar_lea.sflag [#allocation4], %s422
        %s424 = sand.u32 %s63, 1
        %s425 = smul.addr %s424, 128
        %s426 = scalar_lea.vmem [#allocation3], %s425
        // Predicated region
        $region49: #{tpu_custom_call.1} parent=47 // pred_check
          %p427 = pneg %p76
        $region50: #{tpu_custom_call.1} parent=47 // pred_check_branch
          %429 = sbr.rel (%p427) target = $region52
        $region51: #{tpu_custom_call.1} parent=47 // pred_region
          %430 = dma.done %s423, 2048
        $region52: #{tpu_custom_call.1} parent=47 // pred_fallthru
          _
        %s431 = sand.u32 %s36, 1
        %s432 = scalar_lea.sflag [#allocation7], %s431
        %s433 = sand.u32 %s93, 1
        %s434 = smul.addr %s433, 64
        %s435 = scalar_lea.vmem [#allocation6], %s434
        // Predicated region
        $region53: #{tpu_custom_call.1} parent=47 // pred_check
          %p436 = pneg %p106
        $region54: #{tpu_custom_call.1} parent=47 // pred_check_branch
          %438 = sbr.rel (%p436) target = $region56
        $region55: #{tpu_custom_call.1} parent=47 // pred_region
          %439 = dma.done %s432, 1024
        $region56: #{tpu_custom_call.1} parent=47 // pred_fallthru
          _
        %s440 = sand.u32 %s36, 1
        %s441 = scalar_lea.sflag [#allocation7], %s440
        %s442 = sand.u32 %s119, 1
        %s443 = smul.addr %s442, 128
        %s444 = scalar_lea.vmem [#allocation8], %s443
        // Predicated region
        $region57: #{tpu_custom_call.1} parent=47 // pred_check
          %p445 = pneg %p132
        $region58: #{tpu_custom_call.1} parent=47 // pred_check_branch
          %447 = sbr.rel (%p445) target = $region60
        $region59: #{tpu_custom_call.1} parent=47 // pred_region
          %448 = dma.done %s441, 2048
        $region60: #{tpu_custom_call.1} parent=47 // pred_fallthru
          _
        %s449 = sand.u32 %s36, 1
        %s450 = scalar_lea.sflag [#allocation10], %s449
        %s451 = sand.u32 %s145, 1
        %s452 = scalar_lea.vmem [#allocation9], %s451
        // Predicated region
        $region61: #{tpu_custom_call.1} parent=47 // pred_check
          %p453 = pneg %p158
        $region62: #{tpu_custom_call.1} parent=47 // pred_check_branch
          %455 = sbr.rel (%p453) target = $region64
        $region63: #{tpu_custom_call.1} parent=47 // pred_region
          %456 = dma.done %s450, 16
        $region64: #{tpu_custom_call.1} parent=47 // pred_fallthru
          _
        // Predicated region
        $region65: #{tpu_custom_call.1} parent=47 // pred_check
          %p457 = pneg %p179
        $region66: #{tpu_custom_call.1} parent=47 // pred_check_branch
          %459 = sbr.rel (%p457) target = $region68
        $region67: #{tpu_custom_call.1} parent=47 // pred_region
          %460 = dma.done [#allocation10], 2048
        $region68: #{tpu_custom_call.1} parent=47 // pred_fallthru
          _
        // Predicated region
        $region69: #{tpu_custom_call.1} parent=47 // pred_check
          %p461 = pneg %p200
        $region70: #{tpu_custom_call.1} parent=47 // pred_check_branch
          %463 = sbr.rel (%p461) target = $region72
        $region71: #{tpu_custom_call.1} parent=47 // pred_region
          %464 = dma.done [#allocation13], 16
        $region72: #{tpu_custom_call.1} parent=47 // pred_fallthru
          _
        // Predicated region
        $region73: #{tpu_custom_call.1} parent=47 // pred_check
          %p465 = pneg %p221
        $region74: #{tpu_custom_call.1} parent=47 // pred_check_branch
          %467 = sbr.rel (%p465) target = $region76
        $region75: #{tpu_custom_call.1} parent=47 // pred_region
          %468 = dma.done [#allocation13], 16
        $region76: #{tpu_custom_call.1} parent=47 // pred_fallthru
          _
        %s469 = sand.u32 %s63, 1
        %s470 = scalar_lea.sflag [#allocation4], %s469
        %s471 = sand.u32 %s63, 1
        %s472 = smul.addr %s471, 128
        %s473 = scalar_lea.vmem [#allocation3], %s472
        %p474 = pneg %p76
        %p475 = pneg %p73
        %s476 = sand.u32 %s36, 1
        %s477 = scalar_lea.sflag [#allocation7], %s476
        %s478 = sand.u32 %s93, 1
        %s479 = smul.addr %s478, 64
        %s480 = scalar_lea.vmem [#allocation6], %s479
        %p481 = pneg %p106
        %p482 = pneg %p103
        %s483 = sand.u32 %s36, 1
        %s484 = scalar_lea.sflag [#allocation7], %s483
        %s485 = sand.u32 %s119, 1
        %s486 = smul.addr %s485, 128
        %s487 = scalar_lea.vmem [#allocation8], %s486
        %p488 = pneg %p132
        %p489 = pneg %p129
        %s490 = sand.u32 %s36, 1
        %s491 = scalar_lea.sflag [#allocation10], %s490
        %s492 = sand.u32 %s145, 1
        %s493 = scalar_lea.vmem [#allocation9], %s492
        %p494 = pneg %p158
        %p495 = pneg %p155
        %p496 = pneg %p179
        %p497 = pneg %p176
        %p498 = pneg %p200
        %p499 = pneg %p197
        %p500 = pneg %p221
        %p501 = pneg %p218
        %p502 = pneg %p249
        %p503 = pneg %p246
        %s504 = sand.u32 %s236, 1
        %s505 = scalar_lea.sflag [#allocation5], %s504
        %s506 = sand.u32 %s236, 1
        %s507 = smul.addr %s506, 128
        %s508 = scalar_lea.vmem [#allocation15], %s507
        %p509 = pneg %p277
        %p510 = pneg %p274
        %s511 = sand.u32 %s264, 1
        %s512 = scalar_lea.sflag [#allocation17], %s511
        %s513 = sand.u32 %s264, 1
        %s514 = smul.addr %s513, 128
        %s515 = scalar_lea.vmem [#allocation16], %s514
        %s516 = smul.u32 16, %s43
        %s517 = smul.u32 16, %s42
        %s518 = smul.u32 16, %s42
        %s519 = smul.u32 16, %s42
        %p521 = scmp.eq.s32.totalorder %s43, 0
        // Predicated region
        $region77: #{tpu_custom_call.1} parent=47 // pred_check
          %p522 = pneg %p521
        $region78: #{tpu_custom_call.1} parent=47 // pred_check_branch
          %524 = sbr.rel (%p522) target = $region80
        $region79: #{tpu_custom_call.1} parent=47 // pred_region
          %525 = vst [vmem:[#allocation2] sm:$0xff] 0.0
          %526 = vst [vmem:[#allocation2 + $0x8] sm:$0xff] 0.0
          %527 = vst [vmem:[#allocation2 + $0x10] sm:$0xff] 0.0
          %528 = vst [vmem:[#allocation2 + $0x18] sm:$0xff] 0.0
          %529 = vst [vmem:[#allocation2 + $0x20] sm:$0xff] 0.0
          %530 = vst [vmem:[#allocation2 + $0x28] sm:$0xff] 0.0
          %531 = vst [vmem:[#allocation2 + $0x30] sm:$0xff] 0.0
          %532 = vst [vmem:[#allocation2 + $0x38] sm:$0xff] 0.0
          %533 = vst [vmem:[#allocation2 + $0x40] sm:$0xff] 0.0
          %534 = vst [vmem:[#allocation2 + $0x48] sm:$0xff] 0.0
          %535 = vst [vmem:[#allocation2 + $0x50] sm:$0xff] 0.0
          %536 = vst [vmem:[#allocation2 + $0x58] sm:$0xff] 0.0
          %537 = vst [vmem:[#allocation2 + $0x60] sm:$0xff] 0.0
          %538 = vst [vmem:[#allocation2 + $0x68] sm:$0xff] 0.0
          %539 = vst [vmem:[#allocation2 + $0x70] sm:$0xff] 0.0
          %540 = vst [vmem:[#allocation2 + $0x78] sm:$0xff] 0.0
        $region80: #{tpu_custom_call.1} parent=47 // pred_fallthru
          _
        %v541 = vld [vmem:[#allocation2] sm:$0xff]
        %v542 = vld [vmem:[#allocation2 + $0x8] sm:$0xff]
        %v543 = vld [vmem:[#allocation2 + $0x10] sm:$0xff]
        %v544 = vld [vmem:[#allocation2 + $0x18] sm:$0xff]
        %v545 = vld [vmem:[#allocation2 + $0x20] sm:$0xff]
        %v546 = vld [vmem:[#allocation2 + $0x28] sm:$0xff]
        %v547 = vld [vmem:[#allocation2 + $0x30] sm:$0xff]
        %v548 = vld [vmem:[#allocation2 + $0x38] sm:$0xff]
        %v549 = vld [vmem:[#allocation2 + $0x40] sm:$0xff]
        %v550 = vld [vmem:[#allocation2 + $0x48] sm:$0xff]
        %v551 = vld [vmem:[#allocation2 + $0x50] sm:$0xff]
        %v552 = vld [vmem:[#allocation2 + $0x58] sm:$0xff]
        %v553 = vld [vmem:[#allocation2 + $0x60] sm:$0xff]
        %v554 = vld [vmem:[#allocation2 + $0x68] sm:$0xff]
        %v555 = vld [vmem:[#allocation2 + $0x70] sm:$0xff]
        %v556 = vld [vmem:[#allocation2 + $0x78] sm:$0xff]
        %v557 = vld [vmem:[%s435] sm:$0xf]
        %v558 = vld [vmem:[%s435 + $0x4] sm:$0xf]
        %v559 = vld [vmem:[%s435 + $0x8] sm:$0xf]
        %v560 = vld [vmem:[%s435 + $0xc] sm:$0xf]
        %v561 = vld [vmem:[%s435 + $0x10] sm:$0xf]
        %v562 = vld [vmem:[%s435 + $0x14] sm:$0xf]
        %v563 = vld [vmem:[%s435 + $0x18] sm:$0xf]
        %v564 = vld [vmem:[%s435 + $0x1c] sm:$0xf]
        %v565 = vld [vmem:[%s435 + $0x20] sm:$0xf]
        %v566 = vld [vmem:[%s435 + $0x24] sm:$0xf]
        %v567 = vld [vmem:[%s435 + $0x28] sm:$0xf]
        %v568 = vld [vmem:[%s435 + $0x2c] sm:$0xf]
        %v569 = vld [vmem:[%s435 + $0x30] sm:$0xf]
        %v570 = vld [vmem:[%s435 + $0x34] sm:$0xf]
        %v571 = vld [vmem:[%s435 + $0x38] sm:$0xf]
        %v572 = vld [vmem:[%s435 + $0x3c] sm:$0xf]
        %v573 = vld [vmem:[%s426] sm:$0xff]
        %v574 = vld [vmem:[%s426 + $0x8] sm:$0xff]
        %v575 = vld [vmem:[%s426 + $0x10] sm:$0xff]
        %v576 = vld [vmem:[%s426 + $0x18] sm:$0xff]
        %v577 = vld [vmem:[%s426 + $0x20] sm:$0xff]
        %v578 = vld [vmem:[%s426 + $0x28] sm:$0xff]
        %v579 = vld [vmem:[%s426 + $0x30] sm:$0xff]
        %v580 = vld [vmem:[%s426 + $0x38] sm:$0xff]
        %v581 = vld [vmem:[%s426 + $0x40] sm:$0xff]
        %v582 = vld [vmem:[%s426 + $0x48] sm:$0xff]
        %v583 = vld [vmem:[%s426 + $0x50] sm:$0xff]
        %v584 = vld [vmem:[%s426 + $0x58] sm:$0xff]
        %v585 = vld [vmem:[%s426 + $0x60] sm:$0xff]
        %v586 = vld [vmem:[%s426 + $0x68] sm:$0xff]
        %v587 = vld [vmem:[%s426 + $0x70] sm:$0xff]
        %v588 = vld [vmem:[%s426 + $0x78] sm:$0xff]
        %v605 = vunpack.c.l.b16 %v557
        %v606 = vunpack.c.l.b16 %v558
        %v607 = vunpack.c.l.b16 %v559
        %v608 = vunpack.c.l.b16 %v560
        %v609 = vunpack.c.l.b16 %v561
        %v610 = vunpack.c.l.b16 %v562
        %v611 = vunpack.c.l.b16 %v563
        %v612 = vunpack.c.l.b16 %v564
        %v613 = vunpack.c.l.b16 %v565
        %v614 = vunpack.c.l.b16 %v566
        %v615 = vunpack.c.l.b16 %v567
        %v616 = vunpack.c.l.b16 %v568
        %v617 = vunpack.c.l.b16 %v569
        %v618 = vunpack.c.l.b16 %v570
        %v619 = vunpack.c.l.b16 %v571
        %v620 = vunpack.c.l.b16 %v572
        %v621 = vpack.c.b16 %v606, %v605
        %v622 = vpack.c.b16 %v608, %v607
        %v623 = vpack.c.b16 %v610, %v609
        %v624 = vpack.c.b16 %v612, %v611
        %v625 = vpack.c.b16 %v614, %v613
        %v626 = vpack.c.b16 %v616, %v615
        %v627 = vpack.c.b16 %v618, %v617
        %v628 = vpack.c.b16 %v620, %v619
        %637 = vmatprep.subr.mxu0 0.0
        %638 = vmatpush1.msra.mxu0 %v573
        %639 = vmatprep.subr.mxu0 0.0
        %640 = vmatpush1.msra.mxu0 %v574
        %641 = vmatprep.subr.mxu0 0.0
        %642 = vmatpush1.msra.mxu0 %v575
        %643 = vmatprep.subr.mxu0 0.0
        %644 = vmatpush1.msra.mxu0 %v576
        %645 = vmatprep.subr.mxu0 0.0
        %646 = vmatpush1.msra.mxu0 %v577
        %647 = vmatprep.subr.mxu0 0.0
        %648 = vmatpush1.msra.mxu0 %v578
        %649 = vmatprep.subr.mxu0 0.0
        %650 = vmatpush1.msra.mxu0 %v579
        %651 = vmatprep.subr.mxu0 0.0
        %652 = vmatpush1.msra.mxu0 %v580
        %653 = vmatprep.subr.mxu0 0.0
        %654 = vmatpush1.msra.mxu0 %v581
        %655 = vmatprep.subr.mxu0 0.0
        %656 = vmatpush1.msra.mxu0 %v582
        %657 = vmatprep.subr.mxu0 0.0
        %658 = vmatpush1.msra.mxu0 %v583
        %659 = vmatprep.subr.mxu0 0.0
        %660 = vmatpush1.msra.mxu0 %v584
        %661 = vmatprep.subr.mxu0 0.0
        %662 = vmatpush1.msra.mxu0 %v585
        %663 = vmatprep.subr.mxu0 0.0
        %664 = vmatpush1.msra.mxu0 %v586
        %665 = vmatprep.subr.mxu0 0.0
        %666 = vmatpush1.msra.mxu0 %v587
        %667 = vmatprep.subr.mxu0 0.0
        %668 = vmatpush1.msra.mxu0 %v588
        %669 = vmatprep.subr.mxu0 0.0
        %670 = vmatpush1.msra.mxu0 0.0
        %671 = vmatprep.subr.mxu0 0.0
        %672 = vmatpush1.msra.mxu0 0.0
        %673 = vmatprep.subr.mxu0 0.0
        %674 = vmatpush1.msra.mxu0 0.0
        %675 = vmatprep.subr.mxu0 0.0
        %676 = vmatpush1.msra.mxu0 0.0
        %677 = vmatprep.subr.mxu0 0.0
        %678 = vmatpush1.msra.mxu0 0.0
        %679 = vmatprep.subr.mxu0 0.0
        %680 = vmatpush1.msra.mxu0 0.0
        %681 = vmatprep.subr.mxu0 0.0
        %682 = vmatpush1.msra.mxu0 0.0
        %683 = vmatprep.subr.mxu0 0.0
        %684 = vmatpush1.msra.mxu0 0.0
        %685 = vmatprep.subr.mxu0 0.0
        %686 = vmatpush1.msra.mxu0 0.0
        %687 = vmatprep.subr.mxu0 0.0
        %688 = vmatpush1.msra.mxu0 0.0
        %689 = vmatprep.subr.mxu0 0.0
        %690 = vmatpush1.msra.mxu0 0.0
        %691 = vmatprep.subr.mxu0 0.0
        %692 = vmatpush1.msra.mxu0 0.0
        %693 = vmatprep.subr.mxu0 0.0
        %694 = vmatpush1.msra.mxu0 0.0
        %695 = vmatprep.subr.mxu0 0.0
        %696 = vmatpush1.msra.mxu0 0.0
        %697 = vmatprep.subr.mxu0 0.0
        %698 = vmatpush1.msra.mxu0 0.0
        %699 = vmatprep.subr.mxu0 0.0
        %700 = vmatpush1.msra.mxu0 0.0
        %701 = vmatprep.mubr.bf16.mxu0 0
        %702 = vmatmul.mubr.bf16.gmra.mrb[0].mxu0 %v621
        %v703 = vpop.f32.mrb[0].mxu0
        %v704 = vadd.f32 0.0, %v703
        %v705 = vpop.f32.mrb[0].mxu0
        %v706 = vpop.f32.mrb[0].mxu0
        %v707 = vadd.f32 0.0, %v706
        %v708 = vpop.f32.mrb[0].mxu0
        %709 = vmatprep.mubr.bf16.mxu0 0
        %710 = vmatmul.mubr.bf16.gmra.mrb[0].mxu0 %v622
        %v711 = vpop.f32.mrb[0].mxu0
        %v712 = vadd.f32 0.0, %v711
        %v713 = vpop.f32.mrb[0].mxu0
        %v714 = vpop.f32.mrb[0].mxu0
        %v715 = vadd.f32 0.0, %v714
        %v716 = vpop.f32.mrb[0].mxu0
        %717 = vmatprep.mubr.bf16.mxu0 0
        %718 = vmatmul.mubr.bf16.gmra.mrb[0].mxu0 %v623
        %v719 = vpop.f32.mrb[0].mxu0
        %v720 = vadd.f32 0.0, %v719
        %v721 = vpop.f32.mrb[0].mxu0
        %v722 = vpop.f32.mrb[0].mxu0
        %v723 = vadd.f32 0.0, %v722
        %v724 = vpop.f32.mrb[0].mxu0
        %725 = vmatprep.mubr.bf16.mxu0 0
        %726 = vmatmul.mubr.bf16.gmra.mrb[0].mxu0 %v624
        %v727 = vpop.f32.mrb[0].mxu0
        %v728 = vadd.f32 0.0, %v727
        %v729 = vpop.f32.mrb[0].mxu0
        %v730 = vpop.f32.mrb[0].mxu0
        %v731 = vadd.f32 0.0, %v730
        %v732 = vpop.f32.mrb[0].mxu0
        %733 = vmatprep.mubr.bf16.mxu0 0
        %734 = vmatmul.mubr.bf16.gmra.mrb[0].mxu0 %v625
        %v735 = vpop.f32.mrb[0].mxu0
        %v736 = vadd.f32 0.0, %v735
        %v737 = vpop.f32.mrb[0].mxu0
        %v738 = vpop.f32.mrb[0].mxu0
        %v739 = vadd.f32 0.0, %v738
        %v740 = vpop.f32.mrb[0].mxu0
        %741 = vmatprep.mubr.bf16.mxu0 0
        %742 = vmatmul.mubr.bf16.gmra.mrb[0].mxu0 %v626
        %v743 = vpop.f32.mrb[0].mxu0
        %v744 = vadd.f32 0.0, %v743
        %v745 = vpop.f32.mrb[0].mxu0
        %v746 = vpop.f32.mrb[0].mxu0
        %v747 = vadd.f32 0.0, %v746
        %v748 = vpop.f32.mrb[0].mxu0
        %749 = vmatprep.mubr.bf16.mxu0 0
        %750 = vmatmul.mubr.bf16.gmra.mrb[0].mxu0 %v627
        %v751 = vpop.f32.mrb[0].mxu0
        %v752 = vadd.f32 0.0, %v751
        %v753 = vpop.f32.mrb[0].mxu0
        %v754 = vpop.f32.mrb[0].mxu0
        %v755 = vadd.f32 0.0, %v754
        %v756 = vpop.f32.mrb[0].mxu0
        %757 = vmatprep.mubr.bf16.mxu0 0
        %758 = vmatmul.mubr.bf16.gmra.mrb[0].mxu0 %v628
        %v759 = vpop.f32.mrb[0].mxu0
        %v760 = vadd.f32 0.0, %v759
        %v761 = vpop.f32.mrb[0].mxu0
        %v762 = vpop.f32.mrb[0].mxu0
        %v763 = vadd.f32 0.0, %v762
        %v764 = vpop.f32.mrb[0].mxu0
        %765 = vdwg.mxu0
        %v766 = vadd.f32 %v541, %v704
        %v767 = vadd.f32 %v542, %v707
        %v768 = vadd.f32 %v543, %v712
        %v769 = vadd.f32 %v544, %v715
        %v770 = vadd.f32 %v545, %v720
        %v771 = vadd.f32 %v546, %v723
        %v772 = vadd.f32 %v547, %v728
        %v773 = vadd.f32 %v548, %v731
        %v774 = vadd.f32 %v549, %v736
        %v775 = vadd.f32 %v550, %v739
        %v776 = vadd.f32 %v551, %v744
        %v777 = vadd.f32 %v552, %v747
        %v778 = vadd.f32 %v553, %v752
        %v779 = vadd.f32 %v554, %v755
        %v780 = vadd.f32 %v555, %v760
        %v781 = vadd.f32 %v556, %v763
        %782 = vst [vmem:[#allocation2] sm:$0xff] %v766
        %783 = vst [vmem:[#allocation2 + $0x8] sm:$0xff] %v767
        %784 = vst [vmem:[#allocation2 + $0x10] sm:$0xff] %v768
        %785 = vst [vmem:[#allocation2 + $0x18] sm:$0xff] %v769
        %786 = vst [vmem:[#allocation2 + $0x20] sm:$0xff] %v770
        %787 = vst [vmem:[#allocation2 + $0x28] sm:$0xff] %v771
        %788 = vst [vmem:[#allocation2 + $0x30] sm:$0xff] %v772
        %789 = vst [vmem:[#allocation2 + $0x38] sm:$0xff] %v773
        %790 = vst [vmem:[#allocation2 + $0x40] sm:$0xff] %v774
        %791 = vst [vmem:[#allocation2 + $0x48] sm:$0xff] %v775
        %792 = vst [vmem:[#allocation2 + $0x50] sm:$0xff] %v776
        %793 = vst [vmem:[#allocation2 + $0x58] sm:$0xff] %v777
        %794 = vst [vmem:[#allocation2 + $0x60] sm:$0xff] %v778
        %795 = vst [vmem:[#allocation2 + $0x68] sm:$0xff] %v779
        %796 = vst [vmem:[#allocation2 + $0x70] sm:$0xff] %v780
        %797 = vst [vmem:[#allocation2 + $0x78] sm:$0xff] %v781
        %p798 = scmp.eq.s32.totalorder %s43, 2
        // Predicated region
        $region81: #{tpu_custom_call.1} parent=47 // pred_check
          %p799 = pneg %p798
        $region82: #{tpu_custom_call.1} parent=47 // pred_check_branch
          %801 = sbr.rel (%p799) target = $region84
        $region83: #{tpu_custom_call.1} parent=47 // pred_region
          %v802 = vld [vmem:[#allocation2] sm:$0xff]
          %v803 = vld [vmem:[#allocation2 + $0x8] sm:$0xff]
          %v804 = vld [vmem:[#allocation2 + $0x10] sm:$0xff]
          %v805 = vld [vmem:[#allocation2 + $0x18] sm:$0xff]
          %v806 = vld [vmem:[#allocation2 + $0x20] sm:$0xff]
          %v807 = vld [vmem:[#allocation2 + $0x28] sm:$0xff]
          %v808 = vld [vmem:[#allocation2 + $0x30] sm:$0xff]
          %v809 = vld [vmem:[#allocation2 + $0x38] sm:$0xff]
          %v810 = vld [vmem:[#allocation2 + $0x40] sm:$0xff]
          %v811 = vld [vmem:[#allocation2 + $0x48] sm:$0xff]
          %v812 = vld [vmem:[#allocation2 + $0x50] sm:$0xff]
          %v813 = vld [vmem:[#allocation2 + $0x58] sm:$0xff]
          %v814 = vld [vmem:[#allocation2 + $0x60] sm:$0xff]
          %v815 = vld [vmem:[#allocation2 + $0x68] sm:$0xff]
          %v816 = vld [vmem:[#allocation2 + $0x70] sm:$0xff]
          %v817 = vld [vmem:[#allocation2 + $0x78] sm:$0xff]
          %v818 = vld [vmem:[%s444] sm:$0xff]
          %v819 = vld [vmem:[%s444 + $0x8] sm:$0xff]
          %v820 = vld [vmem:[%s444 + $0x10] sm:$0xff]
          %v821 = vld [vmem:[%s444 + $0x18] sm:$0xff]
          %v822 = vld [vmem:[%s444 + $0x20] sm:$0xff]
          %v823 = vld [vmem:[%s444 + $0x28] sm:$0xff]
          %v824 = vld [vmem:[%s444 + $0x30] sm:$0xff]
          %v825 = vld [vmem:[%s444 + $0x38] sm:$0xff]
          %v826 = vld [vmem:[%s444 + $0x40] sm:$0xff]
          %v827 = vld [vmem:[%s444 + $0x48] sm:$0xff]
          %v828 = vld [vmem:[%s444 + $0x50] sm:$0xff]
          %v829 = vld [vmem:[%s444 + $0x58] sm:$0xff]
          %v830 = vld [vmem:[%s444 + $0x60] sm:$0xff]
          %v831 = vld [vmem:[%s444 + $0x68] sm:$0xff]
          %v832 = vld [vmem:[%s444 + $0x70] sm:$0xff]
          %v833 = vld [vmem:[%s444 + $0x78] sm:$0xff]
          %v834 = vld [vmem:[%s452] sm:$0x1]
          %v836 = vlaneseq
          %v837 = vshrl.u32 %v836, 7
          %v838 = vsub.s32 0, %v837
          %v839 = vrot.slane %v834, %v838
          %841 = vmatprep.subr.mxu0 0.0
          %842 = vmatpush1.msra.mxu0 %v818
          %843 = vmatprep.subr.mxu0 0.0
          %844 = vmatpush1.msra.mxu0 %v819
          %845 = vmatprep.subr.mxu0 0.0
          %846 = vmatpush1.msra.mxu0 %v820
          %847 = vmatprep.subr.mxu0 0.0
          %848 = vmatpush1.msra.mxu0 %v821
          %849 = vmatprep.subr.mxu0 0.0
          %850 = vmatpush1.msra.mxu0 %v822
          %851 = vmatprep.subr.mxu0 0.0
          %852 = vmatpush1.msra.mxu0 %v823
          %853 = vmatprep.subr.mxu0 0.0
          %854 = vmatpush1.msra.mxu0 %v824
          %855 = vmatprep.subr.mxu0 0.0
          %856 = vmatpush1.msra.mxu0 %v825
          %857 = vmatprep.subr.mxu0 0.0
          %858 = vmatpush1.msra.mxu0 %v826
          %859 = vmatprep.subr.mxu0 0.0
          %860 = vmatpush1.msra.mxu0 %v827
          %861 = vmatprep.subr.mxu0 0.0
          %862 = vmatpush1.msra.mxu0 %v828
          %863 = vmatprep.subr.mxu0 0.0
          %864 = vmatpush1.msra.mxu0 %v829
          %865 = vmatprep.subr.mxu0 0.0
          %866 = vmatpush1.msra.mxu0 %v830
          %867 = vmatprep.subr.mxu0 0.0
          %868 = vmatpush1.msra.mxu0 %v831
          %869 = vmatprep.subr.mxu0 0.0
          %870 = vmatpush1.msra.mxu0 %v832
          %871 = vmatprep.subr.mxu0 0.0
          %872 = vmatpush1.msra.mxu0 %v833
          %873 = vmatprep.subr.mxu0 0.0
          %874 = vmatpush1.msra.mxu0 0.0
          %875 = vmatprep.subr.mxu0 0.0
          %876 = vmatpush1.msra.mxu0 0.0
          %877 = vmatprep.subr.mxu0 0.0
          %878 = vmatpush1.msra.mxu0 0.0
          %879 = vmatprep.subr.mxu0 0.0
          %880 = vmatpush1.msra.mxu0 0.0
          %881 = vmatprep.subr.mxu0 0.0
          %882 = vmatpush1.msra.mxu0 0.0
          %883 = vmatprep.subr.mxu0 0.0
          %884 = vmatpush1.msra.mxu0 0.0
          %885 = vmatprep.subr.mxu0 0.0
          %886 = vmatpush1.msra.mxu0 0.0
          %887 = vmatprep.subr.mxu0 0.0
          %888 = vmatpush1.msra.mxu0 0.0
          %889 = vmatprep.subr.mxu0 0.0
          %890 = vmatpush1.msra.mxu0 0.0
          %891 = vmatprep.subr.mxu0 0.0
          %892 = vmatpush1.msra.mxu0 0.0
          %893 = vmatprep.subr.mxu0 0.0
          %894 = vmatpush1.msra.mxu0 0.0
          %895 = vmatprep.subr.mxu0 0.0
          %896 = vmatpush1.msra.mxu0 0.0
          %897 = vmatprep.subr.mxu0 0.0
          %898 = vmatpush1.msra.mxu0 0.0
          %899 = vmatprep.subr.mxu0 0.0
          %900 = vmatpush1.msra.mxu0 0.0
          %901 = vmatprep.subr.mxu0 0.0
          %902 = vmatpush1.msra.mxu0 0.0
          %903 = vmatprep.subr.mxu0 0.0
          %904 = vmatpush1.msra.mxu0 0.0
          %905 = vmatprep.mubr.f32.mxu0 0.0
          %906 = vmatmul.mubr.f32.gmra.mrb[0].mxu0 %v802
          %v907 = vpop.f32.mrb[0].mxu0
          %v908 = vadd.f32 %v839, %v907
          %v909 = vpop.f32.mrb[0].mxu0
          %910 = vmatprep.mubr.f32.mxu0 0.0
          %911 = vmatmul.mubr.f32.gmra.mrb[0].mxu0 %v803
          %v912 = vpop.f32.mrb[0].mxu0
          %v913 = vadd.f32 %v839, %v912
          %v914 = vpop.f32.mrb[0].mxu0
          %915 = vmatprep.mubr.f32.mxu0 0.0
          %916 = vmatmul.mubr.f32.gmra.mrb[0].mxu0 %v804
          %v917 = vpop.f32.mrb[0].mxu0
          %v918 = vadd.f32 %v839, %v917
          %v919 = vpop.f32.mrb[0].mxu0
          %920 = vmatprep.mubr.f32.mxu0 0.0
          %921 = vmatmul.mubr.f32.gmra.mrb[0].mxu0 %v805
          %v922 = vpop.f32.mrb[0].mxu0
          %v923 = vadd.f32 %v839, %v922
          %v924 = vpop.f32.mrb[0].mxu0
          %925 = vmatprep.mubr.f32.mxu0 0.0
          %926 = vmatmul.mubr.f32.gmra.mrb[0].mxu0 %v806
          %v927 = vpop.f32.mrb[0].mxu0
          %v928 = vadd.f32 %v839, %v927
          %v929 = vpop.f32.mrb[0].mxu0
          %930 = vmatprep.mubr.f32.mxu0 0.0
          %931 = vmatmul.mubr.f32.gmra.mrb[0].mxu0 %v807
          %v932 = vpop.f32.mrb[0].mxu0
          %v933 = vadd.f32 %v839, %v932
          %v934 = vpop.f32.mrb[0].mxu0
          %935 = vmatprep.mubr.f32.mxu0 0.0
          %936 = vmatmul.mubr.f32.gmra.mrb[0].mxu0 %v808
          %v937 = vpop.f32.mrb[0].mxu0
          %v938 = vadd.f32 %v839, %v937
          %v939 = vpop.f32.mrb[0].mxu0
          %940 = vmatprep.mubr.f32.mxu0 0.0
          %941 = vmatmul.mubr.f32.gmra.mrb[0].mxu0 %v809
          %v942 = vpop.f32.mrb[0].mxu0
          %v943 = vadd.f32 %v839, %v942
          %v944 = vpop.f32.mrb[0].mxu0
          %945 = vmatprep.mubr.f32.mxu0 0.0
          %946 = vmatmul.mubr.f32.gmra.mrb[0].mxu0 %v810
          %v947 = vpop.f32.mrb[0].mxu0
          %v948 = vadd.f32 %v839, %v947
          %v949 = vpop.f32.mrb[0].mxu0
          %950 = vmatprep.mubr.f32.mxu0 0.0
          %951 = vmatmul.mubr.f32.gmra.mrb[0].mxu0 %v811
          %v952 = vpop.f32.mrb[0].mxu0
          %v953 = vadd.f32 %v839, %v952
          %v954 = vpop.f32.mrb[0].mxu0
          %955 = vmatprep.mubr.f32.mxu0 0.0
          %956 = vmatmul.mubr.f32.gmra.mrb[0].mxu0 %v812
          %v957 = vpop.f32.mrb[0].mxu0
          %v958 = vadd.f32 %v839, %v957
          %v959 = vpop.f32.mrb[0].mxu0
          %960 = vmatprep.mubr.f32.mxu0 0.0
          %961 = vmatmul.mubr.f32.gmra.mrb[0].mxu0 %v813
          %v962 = vpop.f32.mrb[0].mxu0
          %v963 = vadd.f32 %v839, %v962
          %v964 = vpop.f32.mrb[0].mxu0
          %965 = vmatprep.mubr.f32.mxu0 0.0
          %966 = vmatmul.mubr.f32.gmra.mrb[0].mxu0 %v814
          %v967 = vpop.f32.mrb[0].mxu0
          %v968 = vadd.f32 %v839, %v967
          %v969 = vpop.f32.mrb[0].mxu0
          %970 = vmatprep.mubr.f32.mxu0 0.0
          %971 = vmatmul.mubr.f32.gmra.mrb[0].mxu0 %v815
          %v972 = vpop.f32.mrb[0].mxu0
          %v973 = vadd.f32 %v839, %v972
          %v974 = vpop.f32.mrb[0].mxu0
          %975 = vmatprep.mubr.f32.mxu0 0.0
          %976 = vmatmul.mubr.f32.gmra.mrb[0].mxu0 %v816
          %v977 = vpop.f32.mrb[0].mxu0
          %v978 = vadd.f32 %v839, %v977
          %v979 = vpop.f32.mrb[0].mxu0
          %980 = vmatprep.mubr.f32.mxu0 0.0
          %981 = vmatmul.mubr.f32.gmra.mrb[0].mxu0 %v817
          %v982 = vpop.f32.mrb[0].mxu0
          %v983 = vadd.f32 %v839, %v982
          %v984 = vpop.f32.mrb[0].mxu0
          %985 = vdwg.mxu0
          %vm986 = vcmp.gt.f32.partialorder %v908, 0.0
          %vm987 = vcmp.gt.f32.partialorder %v913, 0.0
          %vm988 = vcmp.gt.f32.partialorder %v918, 0.0
          %vm989 = vcmp.gt.f32.partialorder %v923, 0.0
          %vm990 = vcmp.gt.f32.partialorder %v928, 0.0
          %vm991 = vcmp.gt.f32.partialorder %v933, 0.0
          %vm992 = vcmp.gt.f32.partialorder %v938, 0.0
          %vm993 = vcmp.gt.f32.partialorder %v943, 0.0
          %vm994 = vcmp.gt.f32.partialorder %v948, 0.0
          %vm995 = vcmp.gt.f32.partialorder %v953, 0.0
          %vm996 = vcmp.gt.f32.partialorder %v958, 0.0
          %vm997 = vcmp.gt.f32.partialorder %v963, 0.0
          %vm998 = vcmp.gt.f32.partialorder %v968, 0.0
          %vm999 = vcmp.gt.f32.partialorder %v973, 0.0
          %vm1000 = vcmp.gt.f32.partialorder %v978, 0.0
          %vm1001 = vcmp.gt.f32.partialorder %v983, 0.0
          %v1002 = vmul.f32 %v908, 1.442695
          %v1003 = vpow.pop %v1002
          %v1004 = vmul.f32 %v913, 1.442695
          %v1005 = vpow.pop %v1004
          %v1006 = vmul.f32 %v918, 1.442695
          %v1007 = vpow.pop %v1006
          %v1008 = vmul.f32 %v923, 1.442695
          %v1009 = vpow.pop %v1008
          %v1010 = vmul.f32 %v928, 1.442695
          %v1011 = vpow.pop %v1010
          %v1012 = vmul.f32 %v933, 1.442695
          %v1013 = vpow.pop %v1012
          %v1014 = vmul.f32 %v938, 1.442695
          %v1015 = vpow.pop %v1014
          %v1016 = vmul.f32 %v943, 1.442695
          %v1017 = vpow.pop %v1016
          %v1018 = vmul.f32 %v948, 1.442695
          %v1019 = vpow.pop %v1018
          %v1020 = vmul.f32 %v953, 1.442695
          %v1021 = vpow.pop %v1020
          %v1022 = vmul.f32 %v958, 1.442695
          %v1023 = vpow.pop %v1022
          %v1024 = vmul.f32 %v963, 1.442695
          %v1025 = vpow.pop %v1024
          %v1026 = vmul.f32 %v968, 1.442695
          %v1027 = vpow.pop %v1026
          %v1028 = vmul.f32 %v973, 1.442695
          %v1029 = vpow.pop %v1028
          %v1030 = vmul.f32 %v978, 1.442695
          %v1031 = vpow.pop %v1030
          %v1032 = vmul.f32 %v983, 1.442695
          %v1033 = vpow.pop %v1032
          %v1034 = vsub.f32 %v1003, 1.0
          %v1035 = vsub.f32 %v1005, 1.0
          %v1036 = vsub.f32 %v1007, 1.0
          %v1037 = vsub.f32 %v1009, 1.0
          %v1038 = vsub.f32 %v1011, 1.0
          %v1039 = vsub.f32 %v1013, 1.0
          %v1040 = vsub.f32 %v1015, 1.0
          %v1041 = vsub.f32 %v1017, 1.0
          %v1042 = vsub.f32 %v1019, 1.0
          %v1043 = vsub.f32 %v1021, 1.0
          %v1044 = vsub.f32 %v1023, 1.0
          %v1045 = vsub.f32 %v1025, 1.0
          %v1046 = vsub.f32 %v1027, 1.0
          %v1047 = vsub.f32 %v1029, 1.0
          %v1048 = vsub.f32 %v1031, 1.0
          %v1049 = vsub.f32 %v1033, 1.0
          %v1050 = vsel %vm986, %v908, %v1034
          %v1051 = vsel %vm987, %v913, %v1035
          %v1052 = vsel %vm988, %v918, %v1036
          %v1053 = vsel %vm989, %v923, %v1037
          %v1054 = vsel %vm990, %v928, %v1038
          %v1055 = vsel %vm991, %v933, %v1039
          %v1056 = vsel %vm992, %v938, %v1040
          %v1057 = vsel %vm993, %v943, %v1041
          %v1058 = vsel %vm994, %v948, %v1042
          %v1059 = vsel %vm995, %v953, %v1043
          %v1060 = vsel %vm996, %v958, %v1044
          %v1061 = vsel %vm997, %v963, %v1045
          %v1062 = vsel %vm998, %v968, %v1046
          %v1063 = vsel %vm999, %v973, %v1047
          %v1064 = vsel %vm1000, %v978, %v1048
          %v1065 = vsel %vm1001, %v983, %v1049
          %1066 = vst [vmem:[%s508] sm:$0xff] %v1050
          %1067 = vst [vmem:[%s508 + $0x8] sm:$0xff] %v1051
          %1068 = vst [vmem:[%s508 + $0x10] sm:$0xff] %v1052
          %1069 = vst [vmem:[%s508 + $0x18] sm:$0xff] %v1053
          %1070 = vst [vmem:[%s508 + $0x20] sm:$0xff] %v1054
          %1071 = vst [vmem:[%s508 + $0x28] sm:$0xff] %v1055
          %1072 = vst [vmem:[%s508 + $0x30] sm:$0xff] %v1056
          %1073 = vst [vmem:[%s508 + $0x38] sm:$0xff] %v1057
          %1074 = vst [vmem:[%s508 + $0x40] sm:$0xff] %v1058
          %1075 = vst [vmem:[%s508 + $0x48] sm:$0xff] %v1059
          %1076 = vst [vmem:[%s508 + $0x50] sm:$0xff] %v1060
          %1077 = vst [vmem:[%s508 + $0x58] sm:$0xff] %v1061
          %1078 = vst [vmem:[%s508 + $0x60] sm:$0xff] %v1062
          %1079 = vst [vmem:[%s508 + $0x68] sm:$0xff] %v1063
          %1080 = vst [vmem:[%s508 + $0x70] sm:$0xff] %v1064
          %1081 = vst [vmem:[%s508 + $0x78] sm:$0xff] %v1065
          %v1082 = vld [vmem:[#allocation11] sm:$0xff]
          %v1083 = vld [vmem:[#allocation11 + $0x8] sm:$0xff]
          %v1084 = vld [vmem:[#allocation11 + $0x10] sm:$0xff]
          %v1085 = vld [vmem:[#allocation11 + $0x18] sm:$0xff]
          %v1086 = vld [vmem:[#allocation11 + $0x20] sm:$0xff]
          %v1087 = vld [vmem:[#allocation11 + $0x28] sm:$0xff]
          %v1088 = vld [vmem:[#allocation11 + $0x30] sm:$0xff]
          %v1089 = vld [vmem:[#allocation11 + $0x38] sm:$0xff]
          %v1090 = vld [vmem:[#allocation11 + $0x40] sm:$0xff]
          %v1091 = vld [vmem:[#allocation11 + $0x48] sm:$0xff]
          %v1092 = vld [vmem:[#allocation11 + $0x50] sm:$0xff]
          %v1093 = vld [vmem:[#allocation11 + $0x58] sm:$0xff]
          %v1094 = vld [vmem:[#allocation11 + $0x60] sm:$0xff]
          %v1095 = vld [vmem:[#allocation11 + $0x68] sm:$0xff]
          %v1096 = vld [vmem:[#allocation11 + $0x70] sm:$0xff]
          %v1097 = vld [vmem:[#allocation11 + $0x78] sm:$0xff]
          %v1098 = vld [vmem:[#allocation12] sm:$0x1]
          %v1100 = vlaneseq
          %v1101 = vshrl.u32 %v1100, 7
          %v1102 = vsub.s32 0, %v1101
          %v1103 = vrot.slane %v1098, %v1102
          %1105 = vmatprep.subr.mxu0 0.0
          %1106 = vmatpush1.msra.mxu0 %v1082
          %1107 = vmatprep.subr.mxu0 0.0
          %1108 = vmatpush1.msra.mxu0 %v1083
          %1109 = vmatprep.subr.mxu0 0.0
          %1110 = vmatpush1.msra.mxu0 %v1084
          %1111 = vmatprep.subr.mxu0 0.0
          %1112 = vmatpush1.msra.mxu0 %v1085
          %1113 = vmatprep.subr.mxu0 0.0
          %1114 = vmatpush1.msra.mxu0 %v1086
          %1115 = vmatprep.subr.mxu0 0.0
          %1116 = vmatpush1.msra.mxu0 %v1087
          %1117 = vmatprep.subr.mxu0 0.0
          %1118 = vmatpush1.msra.mxu0 %v1088
          %1119 = vmatprep.subr.mxu0 0.0
          %1120 = vmatpush1.msra.mxu0 %v1089
          %1121 = vmatprep.subr.mxu0 0.0
          %1122 = vmatpush1.msra.mxu0 %v1090
          %1123 = vmatprep.subr.mxu0 0.0
          %1124 = vmatpush1.msra.mxu0 %v1091
          %1125 = vmatprep.subr.mxu0 0.0
          %1126 = vmatpush1.msra.mxu0 %v1092
          %1127 = vmatprep.subr.mxu0 0.0
          %1128 = vmatpush1.msra.mxu0 %v1093
          %1129 = vmatprep.subr.mxu0 0.0
          %1130 = vmatpush1.msra.mxu0 %v1094
          %1131 = vmatprep.subr.mxu0 0.0
          %1132 = vmatpush1.msra.mxu0 %v1095
          %1133 = vmatprep.subr.mxu0 0.0
          %1134 = vmatpush1.msra.mxu0 %v1096
          %1135 = vmatprep.subr.mxu0 0.0
          %1136 = vmatpush1.msra.mxu0 %v1097
          %1137 = vmatprep.subr.mxu0 0.0
          %1138 = vmatpush1.msra.mxu0 0.0
          %1139 = vmatprep.subr.mxu0 0.0
          %1140 = vmatpush1.msra.mxu0 0.0
          %1141 = vmatprep.subr.mxu0 0.0
          %1142 = vmatpush1.msra.mxu0 0.0
          %1143 = vmatprep.subr.mxu0 0.0
          %1144 = vmatpush1.msra.mxu0 0.0
          %1145 = vmatprep.subr.mxu0 0.0
          %1146 = vmatpush1.msra.mxu0 0.0
          %1147 = vmatprep.subr.mxu0 0.0
          %1148 = vmatpush1.msra.mxu0 0.0
          %1149 = vmatprep.subr.mxu0 0.0
          %1150 = vmatpush1.msra.mxu0 0.0
          %1151 = vmatprep.subr.mxu0 0.0
          %1152 = vmatpush1.msra.mxu0 0.0
          %1153 = vmatprep.subr.mxu0 0.0
          %1154 = vmatpush1.msra.mxu0 0.0
          %1155 = vmatprep.subr.mxu0 0.0
          %1156 = vmatpush1.msra.mxu0 0.0
          %1157 = vmatprep.subr.mxu0 0.0
          %1158 = vmatpush1.msra.mxu0 0.0
          %1159 = vmatprep.subr.mxu0 0.0
          %1160 = vmatpush1.msra.mxu0 0.0
          %1161 = vmatprep.subr.mxu0 0.0
          %1162 = vmatpush1.msra.mxu0 0.0
          %1163 = vmatprep.subr.mxu0 0.0
          %1164 = vmatpush1.msra.mxu0 0.0
          %1165 = vmatprep.subr.mxu0 0.0
          %1166 = vmatpush1.msra.mxu0 0.0
          %1167 = vmatprep.subr.mxu0 0.0
          %1168 = vmatpush1.msra.mxu0 0.0
          %1169 = vmatprep.mubr.f32.mxu0 0.0
          %1170 = vmatmul.mubr.f32.gmra.mrb[0].mxu0 %v1050
          %v1171 = vpop.f32.mrb[0].mxu0
          %v1172 = vadd.f32 %v1103, %v1171
          %v1173 = vpop.f32.mrb[0].mxu0
          %1174 = vmatprep.mubr.f32.mxu0 0.0
          %1175 = vmatmul.mubr.f32.gmra.mrb[0].mxu0 %v1051
          %v1176 = vpop.f32.mrb[0].mxu0
          %v1177 = vadd.f32 %v1103, %v1176
          %v1178 = vpop.f32.mrb[0].mxu0
          %1179 = vmatprep.mubr.f32.mxu0 0.0
          %1180 = vmatmul.mubr.f32.gmra.mrb[0].mxu0 %v1052
          %v1181 = vpop.f32.mrb[0].mxu0
          %v1182 = vadd.f32 %v1103, %v1181
          %v1183 = vpop.f32.mrb[0].mxu0
          %1184 = vmatprep.mubr.f32.mxu0 0.0
          %1185 = vmatmul.mubr.f32.gmra.mrb[0].mxu0 %v1053
          %v1186 = vpop.f32.mrb[0].mxu0
          %v1187 = vadd.f32 %v1103, %v1186
          %v1188 = vpop.f32.mrb[0].mxu0
          %1189 = vmatprep.mubr.f32.mxu0 0.0
          %1190 = vmatmul.mubr.f32.gmra.mrb[0].mxu0 %v1054
          %v1191 = vpop.f32.mrb[0].mxu0
          %v1192 = vadd.f32 %v1103, %v1191
          %v1193 = vpop.f32.mrb[0].mxu0
          %1194 = vmatprep.mubr.f32.mxu0 0.0
          %1195 = vmatmul.mubr.f32.gmra.mrb[0].mxu0 %v1055
          %v1196 = vpop.f32.mrb[0].mxu0
          %v1197 = vadd.f32 %v1103, %v1196
          %v1198 = vpop.f32.mrb[0].mxu0
          %1199 = vmatprep.mubr.f32.mxu0 0.0
          %1200 = vmatmul.mubr.f32.gmra.mrb[0].mxu0 %v1056
          %v1201 = vpop.f32.mrb[0].mxu0
          %v1202 = vadd.f32 %v1103, %v1201
          %v1203 = vpop.f32.mrb[0].mxu0
          %1204 = vmatprep.mubr.f32.mxu0 0.0
          %1205 = vmatmul.mubr.f32.gmra.mrb[0].mxu0 %v1057
          %v1206 = vpop.f32.mrb[0].mxu0
          %v1207 = vadd.f32 %v1103, %v1206
          %v1208 = vpop.f32.mrb[0].mxu0
          %1209 = vmatprep.mubr.f32.mxu0 0.0
          %1210 = vmatmul.mubr.f32.gmra.mrb[0].mxu0 %v1058
          %v1211 = vpop.f32.mrb[0].mxu0
          %v1212 = vadd.f32 %v1103, %v1211
          %v1213 = vpop.f32.mrb[0].mxu0
          %1214 = vmatprep.mubr.f32.mxu0 0.0
          %1215 = vmatmul.mubr.f32.gmra.mrb[0].mxu0 %v1059
          %v1216 = vpop.f32.mrb[0].mxu0
          %v1217 = vadd.f32 %v1103, %v1216
          %v1218 = vpop.f32.mrb[0].mxu0
          %1219 = vmatprep.mubr.f32.mxu0 0.0
          %1220 = vmatmul.mubr.f32.gmra.mrb[0].mxu0 %v1060
          %v1221 = vpop.f32.mrb[0].mxu0
          %v1222 = vadd.f32 %v1103, %v1221
          %v1223 = vpop.f32.mrb[0].mxu0
          %1224 = vmatprep.mubr.f32.mxu0 0.0
          %1225 = vmatmul.mubr.f32.gmra.mrb[0].mxu0 %v1061
          %v1226 = vpop.f32.mrb[0].mxu0
          %v1227 = vadd.f32 %v1103, %v1226
          %v1228 = vpop.f32.mrb[0].mxu0
          %1229 = vmatprep.mubr.f32.mxu0 0.0
          %1230 = vmatmul.mubr.f32.gmra.mrb[0].mxu0 %v1062
          %v1231 = vpop.f32.mrb[0].mxu0
          %v1232 = vadd.f32 %v1103, %v1231
          %v1233 = vpop.f32.mrb[0].mxu0
          %1234 = vmatprep.mubr.f32.mxu0 0.0
          %1235 = vmatmul.mubr.f32.gmra.mrb[0].mxu0 %v1063
          %v1236 = vpop.f32.mrb[0].mxu0
          %v1237 = vadd.f32 %v1103, %v1236
          %v1238 = vpop.f32.mrb[0].mxu0
          %1239 = vmatprep.mubr.f32.mxu0 0.0
          %1240 = vmatmul.mubr.f32.gmra.mrb[0].mxu0 %v1064
          %v1241 = vpop.f32.mrb[0].mxu0
          %v1242 = vadd.f32 %v1103, %v1241
          %v1243 = vpop.f32.mrb[0].mxu0
          %1244 = vmatprep.mubr.f32.mxu0 0.0
          %1245 = vmatmul.mubr.f32.gmra.mrb[0].mxu0 %v1065
          %v1246 = vpop.f32.mrb[0].mxu0
          %v1247 = vadd.f32 %v1103, %v1246
          %v1248 = vpop.f32.mrb[0].mxu0
          %1249 = vdwg.mxu0
          %v1250 = vtanh.pop %v1172
          %v1251 = vtanh.pop %v1177
          %v1252 = vtanh.pop %v1182
          %v1253 = vtanh.pop %v1187
          %v1254 = vtanh.pop %v1192
          %v1255 = vtanh.pop %v1197
          %v1256 = vtanh.pop %v1202
          %v1257 = vtanh.pop %v1207
          %v1258 = vtanh.pop %v1212
          %v1259 = vtanh.pop %v1217
          %v1260 = vtanh.pop %v1222
          %v1261 = vtanh.pop %v1227
          %v1262 = vtanh.pop %v1232
          %v1263 = vtanh.pop %v1237
          %v1264 = vtanh.pop %v1242
          %v1265 = vtanh.pop %v1247
          %v1266 = vld [vmem:[#allocation14] sm:$0x1]
          %v1268 = vlaneseq
          %v1269 = vshrl.u32 %v1268, 7
          %v1270 = vsub.s32 0, %v1269
          %v1271 = vrot.slane %v1266, %v1270
          %v1273 = vmul.f32 %v1250, %v1271
          %v1274 = vmul.f32 %v1251, %v1271
          %v1275 = vmul.f32 %v1252, %v1271
          %v1276 = vmul.f32 %v1253, %v1271
          %v1277 = vmul.f32 %v1254, %v1271
          %v1278 = vmul.f32 %v1255, %v1271
          %v1279 = vmul.f32 %v1256, %v1271
          %v1280 = vmul.f32 %v1257, %v1271
          %v1281 = vmul.f32 %v1258, %v1271
          %v1282 = vmul.f32 %v1259, %v1271
          %v1283 = vmul.f32 %v1260, %v1271
          %v1284 = vmul.f32 %v1261, %v1271
          %v1285 = vmul.f32 %v1262, %v1271
          %v1286 = vmul.f32 %v1263, %v1271
          %v1287 = vmul.f32 %v1264, %v1271
          %v1288 = vmul.f32 %v1265, %v1271
          %1289 = vadd.xlane.f32.xlu0 %v1273
          %v1290 = vpop.xlane.xlu0 %1289
          %1291 = vadd.xlane.f32.xlu0 %v1274
          %v1292 = vpop.xlane.xlu0 %1291
          %1293 = vadd.xlane.f32.xlu0 %v1275
          %v1294 = vpop.xlane.xlu0 %1293
          %1295 = vadd.xlane.f32.xlu0 %v1276
          %v1296 = vpop.xlane.xlu0 %1295
          %1297 = vadd.xlane.f32.xlu0 %v1277
          %v1298 = vpop.xlane.xlu0 %1297
          %1299 = vadd.xlane.f32.xlu0 %v1278
          %v1300 = vpop.xlane.xlu0 %1299
          %1301 = vadd.xlane.f32.xlu0 %v1279
          %v1302 = vpop.xlane.xlu0 %1301
          %1303 = vadd.xlane.f32.xlu0 %v1280
          %v1304 = vpop.xlane.xlu0 %1303
          %1305 = vadd.xlane.f32.xlu0 %v1281
          %v1306 = vpop.xlane.xlu0 %1305
          %1307 = vadd.xlane.f32.xlu0 %v1282
          %v1308 = vpop.xlane.xlu0 %1307
          %1309 = vadd.xlane.f32.xlu0 %v1283
          %v1310 = vpop.xlane.xlu0 %1309
          %1311 = vadd.xlane.f32.xlu0 %v1284
          %v1312 = vpop.xlane.xlu0 %1311
          %1313 = vadd.xlane.f32.xlu0 %v1285
          %v1314 = vpop.xlane.xlu0 %1313
          %1315 = vadd.xlane.f32.xlu0 %v1286
          %v1316 = vpop.xlane.xlu0 %1315
          %1317 = vadd.xlane.f32.xlu0 %v1287
          %v1318 = vpop.xlane.xlu0 %1317
          %1319 = vadd.xlane.f32.xlu0 %v1288
          %v1320 = vpop.xlane.xlu0 %1319
          %vm1321 = vcmask 7168
          %1322 = vst.msk [vmem:[%s515] sm:$0xff] %vm1321, %v1290
          %1323 = vst.msk [vmem:[%s515 + $0x8] sm:$0xff] %vm1321, %v1292
          %1324 = vst.msk [vmem:[%s515 + $0x10] sm:$0xff] %vm1321, %v1294
          %1325 = vst.msk [vmem:[%s515 + $0x18] sm:$0xff] %vm1321, %v1296
          %1326 = vst.msk [vmem:[%s515 + $0x20] sm:$0xff] %vm1321, %v1298
          %1327 = vst.msk [vmem:[%s515 + $0x28] sm:$0xff] %vm1321, %v1300
          %1328 = vst.msk [vmem:[%s515 + $0x30] sm:$0xff] %vm1321, %v1302
          %1329 = vst.msk [vmem:[%s515 + $0x38] sm:$0xff] %vm1321, %v1304
          %1330 = vst.msk [vmem:[%s515 + $0x40] sm:$0xff] %vm1321, %v1306
          %1331 = vst.msk [vmem:[%s515 + $0x48] sm:$0xff] %vm1321, %v1308
          %1332 = vst.msk [vmem:[%s515 + $0x50] sm:$0xff] %vm1321, %v1310
          %1333 = vst.msk [vmem:[%s515 + $0x58] sm:$0xff] %vm1321, %v1312
          %1334 = vst.msk [vmem:[%s515 + $0x60] sm:$0xff] %vm1321, %v1314
          %1335 = vst.msk [vmem:[%s515 + $0x68] sm:$0xff] %vm1321, %v1316
          %1336 = vst.msk [vmem:[%s515 + $0x70] sm:$0xff] %vm1321, %v1318
          %1337 = vst.msk [vmem:[%s515 + $0x78] sm:$0xff] %vm1321, %v1320
        $region84: #{tpu_custom_call.1} parent=47 // pred_fallthru
          _
        %s1338 = sand.u32 %s236, 1
        %s1339 = scalar_lea.sflag [#allocation5], %s1338
        %s1340 = sand.u32 %s236, 1
        %s1341 = smul.addr %s1340, 128
        %s1342 = scalar_lea.vmem [#allocation15], %s1341
        %s1343 = sand.u32 %s264, 1
        %s1344 = scalar_lea.sflag [#allocation17], %s1343
        %s1345 = sand.u32 %s264, 1
        %s1346 = smul.addr %s1345, 128
        %s1347 = scalar_lea.vmem [#allocation16], %s1346
        // Predicated region
        $region85: #{tpu_custom_call.1} parent=47 // pred_check
          %p1348 = pneg %p246
        $region86: #{tpu_custom_call.1} parent=47 // pred_check_branch
          %1350 = sbr.rel (%p1348) target = $region88
        $region87: #{tpu_custom_call.1} parent=47 // pred_region
          %s1351 = smul.u32 16, %s42
          %s1353 = ssub.s32 2048, 2048
          %1354 = vsyncadd %s1339, %s1353
          %s1355 = smul.addr %s41, 48
          %s1356 = sadd.s32 %s1351, %s1355
          %s1357 = smul.addr %s1356, 128
          %s1358 = scalar_lea.hbm %s7, %s1357
          %s1359 = sshll.u32 %s1342, 4
          %s1360 = int_to_ptr.vmem [resolvable:$true] %s1359
          %1365 = dma.vmem_to_hbm [thread:$0]  %s1360, 2048, %s1358, %s1339, 128, 128, 8
        $region88: #{tpu_custom_call.1} parent=47 // pred_fallthru
          _
        // Predicated region
        $region89: #{tpu_custom_call.1} parent=47 // pred_check
          %p1366 = pneg %p274
        $region90: #{tpu_custom_call.1} parent=47 // pred_check_branch
          %1368 = sbr.rel (%p1366) target = $region92
        $region91: #{tpu_custom_call.1} parent=47 // pred_region
          %s1369 = smul.u32 16, %s42
          %s1371 = ssub.s32 2048, 2048
          %1372 = vsyncadd %s1344, %s1371
          %s1373 = smul.addr %s41, 48
          %s1374 = sadd.s32 %s1369, %s1373
          %s1375 = smul.addr %s1374, 128
          %s1376 = scalar_lea.hbm %s8, %s1375
          %s1377 = sshll.u32 %s1347, 4
          %s1378 = int_to_ptr.vmem [resolvable:$true] %s1377
          %1383 = dma.vmem_to_hbm [thread:$0]  %s1378, 2048, %s1376, %s1344, 128, 128, 8
        $region92: #{tpu_custom_call.1} parent=47 // pred_fallthru
          _
      $region48: #{tpu_custom_call.1} parent=5 // pred_fallthru
        _
      %p1384 = scmp.le.s32.totalorder 2, %s31
      // Predicated region
      $region93: #{tpu_custom_call.1} parent=5 // pred_check
        %p1385 = pneg %p1384
      $region94: #{tpu_custom_call.1} parent=5 // pred_check_branch
        %1387 = sbr.rel (%p1385) target = $region96
      $region95: #{tpu_custom_call.1} parent=5 // pred_region
        %s1388 = ssub.s32 %s31, 2
        // Predicated region
        $region97: #{tpu_custom_call.1} parent=95 // pred_check
          %p1389 = pneg %p252
        $region98: #{tpu_custom_call.1} parent=95 // pred_check_branch
          %1391 = sbr.rel (%p1389) target = $region100
        $region99: #{tpu_custom_call.1} parent=95 // pred_region
          %s1392 = sand.u32 %s237, 1
          %s1393 = scalar_lea.sflag [#allocation5], %s1392
          %s1394 = sand.u32 %s237, 1
          %s1395 = smul.addr %s1394, 128
          %s1396 = scalar_lea.vmem [#allocation15], %s1395
          %1397 = dma.done %s1393, 2048
        $region100: #{tpu_custom_call.1} parent=95 // pred_fallthru
          _
        // Predicated region
        $region101: #{tpu_custom_call.1} parent=95 // pred_check
          %p1398 = pneg %p280
        $region102: #{tpu_custom_call.1} parent=95 // pred_check_branch
          %1400 = sbr.rel (%p1398) target = $region104
        $region103: #{tpu_custom_call.1} parent=95 // pred_region
          %s1401 = sand.u32 %s265, 1
          %s1402 = scalar_lea.sflag [#allocation17], %s1401
          %s1403 = sand.u32 %s265, 1
          %s1404 = smul.addr %s1403, 128
          %s1405 = scalar_lea.vmem [#allocation16], %s1404
          %1406 = dma.done %s1402, 2048
        $region104: #{tpu_custom_call.1} parent=95 // pred_fallthru
          _
      $region96: #{tpu_custom_call.1} parent=5 // pred_fallthru
        _
    $region6: #{tpu_custom_call.1} parent=1 // loop_footer
      %s35 = sadd.s32 1, %s31
    $region7: #{tpu_custom_call.1} parent=1 // loop_footer_branch
      %30 = sbr.rel target = $region3
    $region8: #{tpu_custom_call.1} parent=1 // loop_exit
      _
    %1407 = vsyncpa [#allocation4], 1
    %s1408 = scalar_lea.sflag [#allocation4], 1
    %1409 = vsyncpa %s1408, 1
    %1410 = vsyncpa [#allocation7], 1
    %s1411 = scalar_lea.sflag [#allocation7], 1
    %1412 = vsyncpa %s1411, 1
    %1413 = vsyncpa [#allocation10], 1
    %s1414 = scalar_lea.sflag [#allocation10], 1
    %1415 = vsyncpa %s1414, 1
    %1416 = vsyncpa [#allocation13], 1
    %1417 = vsyncpa [#allocation5], 1
    %s1418 = scalar_lea.sflag [#allocation5], 1
    %1419 = vsyncpa %s1418, 1
    %1420 = vsyncpa [#allocation17], 1
    %s1421 = scalar_lea.sflag [#allocation17], 1
    %1422 = vsyncpa %s1421, 1

</llo_original>
